<compile_context>
chip_gen: v5e
topology: v5e:2x2
jax: 0.10.0
libtpu: 0.0.40
codegen_flags: <defaults>
</compile_context>

<pallas_src>
import math

import jax
import jax.numpy as jnp
from jax.experimental import pallas as pl
from jax.experimental.pallas import tpu as pltpu

# ---------------- irreps configuration ----------------
# irreps_x      = MUL x (0e + 1o)   -> lmax_x = 1, per-mul dim = 4
# irreps_filter = 1   x (0e + 1o)   -> lmax_f = 1, dim = 4
# irreps_out    = MUL x (0e+1o+2e)  -> lmax_o = 2, per-mul dim = 9, n_paths = 3
MUL = 4
LMAX_X, LMAX_F, LMAX_O = 1, 1, 2
LS_X = tuple(range(LMAX_X + 1))
LS_O = tuple(range(LMAX_O + 1))
DIM_X = sum(2 * l + 1 for l in LS_X)                 # 4
DIM_F = sum(2 * l + 1 for l in range(LMAX_F + 1))    # 4
DOUT = sum(2 * l + 1 for l in LS_O)                  # 9
NPATH = LMAX_O + 1                                   # 3

UV1 = 2 * LMAX_X + 1                                 # 3
UV2 = 2 * LMAX_F + 1                                 # 3
CONV = UV1 + UV2 - 1                                 # 5   (= 2*L_true + 1)
C2 = CONV * CONV                                     # 25

N_NODE = 8
N_EDGE = 14
DIN = 8            # weight_layer_input_to_hidden[0] (edge embedding dim)
HID = 16           # hidden width of weight_nn

# ---------------- performance knobs ----------------
TE = 512           # edge tile (sweep 512-2048); ~0.3 MB/tile of bf16 inputs, fits VMEM easily
DOUT_PAD = 128     # lane-dense output slab (MUL*DOUT = 36 zero-padded to 128)

DENOM = 1.0        # self.denominator (train_denominator=False)
W_SHIFT = 0.0
W_SCALE = 1.0


def _detect_core_split():
    """NCORES=2 + CORE_PARALLEL only on dual-TensorCore chips (v7x); 1 elsewhere."""
    kind = ""
    try:
        kind = jax.devices()[0].device_kind.lower()
    except Exception:
        pass
    if "v7" in kind:
        # plain "parallel" does not shard across v7x's two TensorCores; CORE_PARALLEL does
        return 2, getattr(pltpu, "CORE_PARALLEL", "parallel")
    return 1, "arbitrary"


NCORES, _CORE_SEM = _detect_core_split()


# ---------------- ShiftedSoftPlus ----------------
def _ssp(x):
    # softplus(x) - log(2), numerically stable, lowers to VPU/EUP ops
    return jnp.where(x > 0, x, 0.0) + jnp.log1p(jnp.exp(-jnp.abs(x))) - math.log(2.0)


# ---------------- Pallas kernel ----------------
def _gaunt_conv_kernel(dst_ref, xf_ref, yf_ref, win_ref, b1_ref,
                       w1_ref, w2a_ref, pbd_ref, out_ref):
    t = pl.program_id(1)

    @pl.when(t == 0)
    def _init():
        out_ref[...] = jnp.zeros_like(out_ref)

    # --- per-edge weight MLP; A_bd folded into W2A host-side (one matmul fewer) ---
    h = jnp.dot(win_ref[...], w1_ref[...],
                preferred_element_type=jnp.float32) + b1_ref[...]    # (TE, HID) f32
    h = _ssp(h)                                                      # f32 on VPU/EUP
    wa = jnp.dot(h.astype(jnp.bfloat16), w2a_ref[...],
                 preferred_element_type=jnp.float32)                 # (TE, DOUT_PAD) f32

    # --- fused per-edge Fourier-grid product, all muls at once ---
    # yf was pre-tiled host-side to MUL*C2, so this is an aligned same-shape multiply
    # (no per-tile XLU lane shuffles); the product itself is computed in f32.
    conv = (xf_ref[...].astype(jnp.float32)
            * yf_ref[...].astype(jnp.float32)).astype(jnp.bfloat16)  # (TE, MUL*C2)

    # rfft2 + ToSphericalBasis folded into ONE block-diagonal matmul (K=MUL*C2, N=DOUT_PAD)
    # TODO(synk): at production MUL (>=16) the block-diagonal padding wastes O(MUL^2) MACs;
    # switch to a per-mul batched contraction / (TE*MUL, C2) x (C2, DOUT) repack.
    msg = jnp.dot(conv, pbd_ref[...],
                  preferred_element_type=jnp.float32)                # (TE, DOUT_PAD) f32
    msg = (msg * wa).astype(jnp.bfloat16)                            # message (path_w, 1/denom folded)

    # --- scatter-sum over destination nodes as ONE matmul (message_gather) ---
    # dst is lane-dense (1, TE); padded edges carry the sentinel N_NODE -> all-zero one-hot row.
    dst = dst_ref[...]                                               # (1, TE) int32
    node_iota = jax.lax.broadcasted_iota(jnp.int32, (N_NODE, TE), 0)
    onehot = (node_iota == dst).astype(jnp.bfloat16)                 # (N_NODE, TE)
    out_ref[...] += jnp.dot(onehot, msg, preferred_element_type=jnp.float32)
    # TODO(synk): for large graphs, sort edges by dst host-side and scatter into a small
    # node window per tile (scalar-prefetched offsets) instead of the dense one-hot matmul.
    # TODO(synk): on v7x, xf_src/yf could be stored fp8 (e4m3) with a per-tile scale for
    # another 2x DMA saving; accuracy-gated, not enabled here.


def gaunt_message_passing(dst_row, xf_src, yf_t, w_in, params):
    e_pad = xf_src.shape[0]
    assert e_pad % (NCORES * TE) == 0
    n_half = e_pad // (NCORES * TE)
    edge_blk = lambda c, t: (c * n_half + t, 0)

    grid_spec = pltpu.PrefetchScalarGridSpec(
        num_scalar_prefetch=0,
        grid=(NCORES, n_half),
        in_specs=[
            pl.BlockSpec((1, TE), lambda c, t: (0, c * n_half + t)),     # edge_dst (lane-dense)
            pl.BlockSpec((TE, MUL * C2), edge_blk),                      # xf[edge_src] bf16
            pl.BlockSpec((TE, MUL * C2), edge_blk),                      # yf pre-tiled bf16
            pl.BlockSpec((TE, DIN), edge_blk),                           # edge_embed bf16
            pl.BlockSpec((1, HID), lambda c, t: (0, 0)),                 # MLP bias (w_shift fold)
            pl.BlockSpec((DIN, HID), lambda c, t: (0, 0)),               # W1 (bf16, folded)
            pl.BlockSpec((HID, DOUT_PAD), lambda c, t: (0, 0)),          # W2A = W2f @ A_bd (bf16)
            pl.BlockSpec((MUL * C2, DOUT_PAD), lambda c, t: (0, 0)),     # block-diag proj
        ],
        # per-core partial output, accumulated across the (arbitrary) edge-tile axis
        out_specs=pl.BlockSpec((None, N_NODE, DOUT_PAD), lambda c, t: (c, 0, 0)),
    )
    return pl.pallas_call(
        _gaunt_conv_kernel,
        grid_spec=grid_spec,
        out_shape=jax.ShapeDtypeStruct((NCORES, N_NODE, DOUT_PAD), jnp.float32),
        compiler_params=pltpu.CompilerParams(
            dimension_semantics=(_CORE_SEM, "arbitrary")),
    )(dst_row, xf_src, yf_t, w_in,
      params['b1'], params['W1f'], params['W2A'], params['P_bd'])


# ---------------- JAX glue (layout conversion, Fourier preprocessing) ----------------
def _reshape_irreps(x_flat, mul, ls):
    # e3nn flat layout (N, sum_l mul*(2l+1)) -> strided (N, mul, sum_l (2l+1))
    chunks, off = [], 0
    for l in ls:
        d = 2 * l + 1
        chunks.append(x_flat[:, off:off + mul * d].reshape(-1, mul, d))
        off += mul * d
    return jnp.concatenate(chunks, axis=-1)


def _reshape_irreps_reverse(x_r, mul, ls):
    chunks, off = [], 0
    for l in ls:
        d = 2 * l + 1
        chunks.append(x_r[:, :, off:off + d].reshape(-1, mul * d))
        off += d
    return jnp.concatenate(chunks, axis=-1)


def _to_fft_grid(coeffs, basis, pad):
    # coeffs: (B, mul, dim) real; basis: (dim, uv, uv) complex "ToFourierBasis" matrix
    f = jnp.einsum('bmd,duv->bmuv', coeffs.astype(jnp.complex64), basis)
    f = jnp.pad(f, [(0, 0), (0, 0), (pad, pad), (pad, pad)])
    # NOTE: reference calls torch.fft.ifftshift without dim; the intended shift is the two
    # Fourier axes, which is what we apply here.
    f = jnp.fft.ifftshift(f, axes=(-2, -1))[..., : CONV // 2 + 1]
    return jnp.fft.irfft2(f, s=(CONV, CONV), norm='backward')   # real (B, mul, CONV, CONV)


def _prepare_kernel_inputs(x, edge_attr, edge_embed, edge_index, params):
    edge_src = edge_index[1]
    edge_dst = edge_index[0]

    # filter path: _filter_to_fourier -> pad -> ifftshift -> irfft2 ("edge_fft")
    pad_y = (CONV - UV2) // 2
    yf = _to_fft_grid(edge_attr[:, None, :], params['B_filter'], pad_y)     # (E,1,CONV,CONV)

    # node path: layout convert -> _x_to_fourier -> pad -> ifftshift -> irfft2
    x_r = _reshape_irreps(x, MUL, LS_X)                                     # (N, MUL, DIM_X)
    pad_x = (CONV - UV1) // 2
    xf = _to_fft_grid(x_r, params['B_x'], pad_x)                            # (N,MUL,CONV,CONV)

    # gather source-node grids per edge (glue; the scatter reduction runs in the kernel)
    xf_src = xf[edge_src].reshape(-1, MUL * C2)
    yf_e = yf.reshape(-1, C2)

    # pad edge dim to a multiple of NCORES*TE; padded edges get the out-of-range
    # sentinel N_NODE so the in-kernel one-hot drops them regardless of their features.
    e = xf_src.shape[0]
    chunk = NCORES * TE
    e_pad = ((e + chunk - 1) // chunk) * chunk
    p = e_pad - e
    xf_src = jnp.pad(xf_src, ((0, p), (0, 0)))
    yf_e = jnp.pad(yf_e, ((0, p), (0, 0)))
    w_in = jnp.pad(edge_embed, ((0, p), (0, 0)))
    dst_row = jnp.pad(edge_dst.astype(jnp.int32), (0, p),
                      constant_values=N_NODE).reshape(1, -1)

    # bf16 HBM slabs for the kernel (kernel is HBM-bound at scale; casts fuse into the
    # gather/pad); yf is pre-tiled to MUL*C2 here so the in-kernel product is lane-aligned.
    kernel_in = (dst_row,
                 xf_src.astype(jnp.bfloat16),
                 jnp.tile(yf_e, (1, MUL)).astype(jnp.bfloat16),
                 w_in.astype(jnp.bfloat16))
    ref_in = (xf_src, yf_e, w_in)   # f32 copies for the reference check
    return kernel_in, ref_in, e


def hermitian_gaunt_convolution(x, edge_attr, edge_embed, edge_index, params):
    kernel_in, _, _ = _prepare_kernel_inputs(
        x, edge_attr, edge_embed, edge_index, params)
    out_part = gaunt_message_passing(*kernel_in, params)
    out_flat = out_part.sum(axis=0)[:, :MUL * DOUT]   # reduce per-core partials, drop lane pad
    out = out_flat.reshape(N_NODE, MUL, DOUT)
    return _reshape_irreps_reverse(out, MUL, LS_O)    # (N, irreps_out.dim)


# ---------------- deterministic parameter construction ----------------
def make_params(key):
    ks = jax.random.split(key, 5)

    def cplx(k, shape, scale=0.3):
        kr, ki = jax.random.split(k)
        return (scale * jax.random.normal(kr, shape)
                + 1j * scale * jax.random.normal(ki, shape)).astype(jnp.complex64)

    # TODO(synk): synthetic stand-ins for gutil.ToFourierBasis / ToSphericalBasis / fit_gaunt_to_w3j
    B_x = cplx(ks[0], (DIM_X, UV1, UV1))
    B_filter = cplx(ks[1], (DIM_F, UV2, UV2))
    S_sph = cplx(ks[2], (CONV * (CONV // 2 + 1), DOUT))

    # fold rfft2 (norm='backward') + hermitian-input ToSphericalBasis into one REAL matrix
    dft = jnp.fft.rfft2(jnp.eye(C2, dtype=jnp.float32).reshape(C2, CONV, CONV),
                        norm='backward').reshape(C2, CONV * (CONV // 2 + 1))
    M_proj = jnp.real(dft @ S_sph).astype(jnp.float32)            # (C2, DOUT)

    # a_w = weight_align_matrix(lmax_out) with rows scaled by path_w = sqrt(2l+1)
    rows, off = [], 0
    for l in LS_O:
        row = jnp.zeros((DOUT,), jnp.float32).at[off:off + 2 * l + 1].set(1.0)
        rows.append(row * math.sqrt(2 * l + 1))
        off += 2 * l + 1
    a_w = jnp.stack(rows)                                         # (NPATH, DOUT)

    W1 = jax.random.normal(ks[3], (DIN, HID), jnp.float32)
    W2 = jax.random.normal(ks[4], (HID, MUL * NPATH), jnp.float32)

    # ---- host-side constant folds / fused bf16 kernel parameters ----
    # h_pre = (w_scale*(win - w_shift)) @ W1/sqrt(DIN)  ==  win @ W1f + b1
    W1f = (W1 * (W_SCALE / math.sqrt(DIN))).astype(jnp.bfloat16)
    b1 = (-(W_SHIFT * W_SCALE / math.sqrt(DIN))
          * jnp.sum(W1, axis=0, keepdims=True)).astype(jnp.float32)     # (1, HID)

    # block-diagonal (over MUL) projection; a_w block-diag with 1/denominator folded,
    # then folded into W2 (no nonlinearity between the two linears): W2A = W2f @ A_bd.
    P_bd = jnp.zeros((MUL * C2, DOUT_PAD), jnp.float32)
    A_bd = jnp.zeros((MUL * NPATH, DOUT_PAD), jnp.float32)
    for m in range(MUL):
        P_bd = P_bd.at[m * C2:(m + 1) * C2, m * DOUT:(m + 1) * DOUT].set(M_proj)
        A_bd = A_bd.at[m * NPATH:(m + 1) * NPATH, m * DOUT:(m + 1) * DOUT].set(a_w / DENOM)
    W2A = ((W2 * (1.0 / math.sqrt(HID))) @ A_bd).astype(jnp.bfloat16)   # (HID, DOUT_PAD)
    P_bd = P_bd.astype(jnp.bfloat16)

    return dict(B_x=B_x, B_filter=B_filter, M_proj=M_proj, a_w=a_w, W1=W1, W2=W2,
                W1f=W1f, b1=b1, W2A=W2A, P_bd=P_bd)


# ---------------- pure-JAX f32 reference of the kernel hot path (original unfused math) ----------------
def _reference_message_passing(xf_src, yf, w_in, dst_row, params, n_valid):
    xf = xf_src[:n_valid].reshape(n_valid, MUL, C2)
    yfv = yf[:n_valid]
    dst = dst_row[0, :n_valid]
    win = W_SCALE * (w_in[:n_valid] - W_SHIFT)
    h = _ssp(win @ params['W1'] / math.sqrt(DIN))
    w = (h @ params['W2']) / math.sqrt(HID)
    w = w.reshape(n_valid, MUL, NPATH)
    conv = xf * yfv[:, None, :]
    msg = jnp.einsum('emc,cd->emd', conv, params['M_proj'])
    wa = jnp.einsum('emp,pd->emd', w, params['a_w'])
    out = jnp.zeros((N_NODE, MUL, DOUT), jnp.float32).at[dst].add(msg * wa)
    return (out / DENOM).reshape(N_NODE, MUL * DOUT)


if __name__ == "__main__":
    key = jax.random.PRNGKey(0)
    k_x, k_attr, k_emb, k_idx, k_p = jax.random.split(key, 5)
    params = make_params(k_p)

    x = jax.random.normal(k_x, (N_NODE, MUL * DIM_X), jnp.float32)        # (8, 16)
    edge_attr = jax.random.normal(k_attr, (N_EDGE, DIM_F), jnp.float32)   # (14, 4)
    edge_embed = jax.random.normal(k_emb, (N_EDGE, DIN), jnp.float32)     # (14, 8)
    edge_index = jax.random.randint(k_idx, (2, N_EDGE), 0, N_NODE, dtype=jnp.int32)

    out = hermitian_gaunt_convolution(x, edge_attr, edge_embed, edge_index, params)
    out = jax.block_until_ready(out)
    assert out.shape == (N_NODE, MUL * DOUT)

    # sanity-check the (bf16-input, fused) Pallas kernel against the f32 original-form reference
    kernel_in, ref_in, n_valid = _prepare_kernel_inputs(
        x, edge_attr, edge_embed, edge_index, params)
    dst_row = kernel_in[0]
    ref_flat = _reference_message_passing(*ref_in, dst_row, params, n_valid)
    ref = _reshape_irreps_reverse(ref_flat.reshape(N_NODE, MUL, DOUT), MUL, LS_O)
    ref = jax.block_until_ready(ref)
    assert jnp.allclose(out, ref, atol=5e-2, rtol=5e-2), "Pallas kernel mismatch vs reference"

    print("KERNEL_OK")
</pallas_src>

<mosaic_0001>
module attributes {stable_mosaic.version = 11 : i64} {
  func.func @_gaunt_conv_kernel(%arg0: i32, %arg1: i32, %arg2: memref<1x512xi32, #tpu.memory_space<vmem>>, %arg3: memref<512x100xbf16, #tpu.memory_space<vmem>>, %arg4: memref<512x100xbf16, #tpu.memory_space<vmem>>, %arg5: memref<512x8xbf16, #tpu.memory_space<vmem>>, %arg6: memref<1x16xf32, #tpu.memory_space<vmem>>, %arg7: memref<8x16xbf16, #tpu.memory_space<vmem>>, %arg8: memref<16x128xbf16, #tpu.memory_space<vmem>>, %arg9: memref<100x128xbf16, #tpu.memory_space<vmem>>, %arg10: memref<1x8x128xf32, #tpu.memory_space<vmem>>) attributes {dimension_semantics = [#tpu.dimension_semantics<arbitrary>, #tpu.dimension_semantics<arbitrary>], iteration_bounds = array<i64: 1, 1>, scalar_prefetch = 0 : i64, scratch_operands = 0 : i64, tpu.core_type = #tpu.core_type<tc>, window_params = [{transform_indices = @transform_0, window_bounds = array<i64: 1, 512>}, {transform_indices = @transform_1, window_bounds = array<i64: 512, 100>}, {transform_indices = @transform_2, window_bounds = array<i64: 512, 100>}, {transform_indices = @transform_3, window_bounds = array<i64: 512, 8>}, {pipeline_mode = #tpu.pipeline_mode<synchronous>, transform_indices = @transform_4, window_bounds = array<i64: 1, 16>}, {pipeline_mode = #tpu.pipeline_mode<synchronous>, transform_indices = @transform_5, window_bounds = array<i64: 8, 16>}, {pipeline_mode = #tpu.pipeline_mode<synchronous>, transform_indices = @transform_6, window_bounds = array<i64: 16, 128>}, {pipeline_mode = #tpu.pipeline_mode<synchronous>, transform_indices = @transform_7, window_bounds = array<i64: 100, 128>}, {transform_indices = @transform_8, window_bounds = array<i64: 1, 8, 128>}]} {
    %c0_i32 = arith.constant 0 : i32
    %0 = arith.cmpi eq, %arg1, %c0_i32 : i32
    %1 = arith.extui %0 : i1 to i32
    %c0_i32_0 = arith.constant 0 : i32
    %2 = arith.cmpi ne, %1, %c0_i32_0 : i32
    scf.if %2 {
      %cst_29 = arith.constant 0.000000e+00 : f32
      %48 = vector.broadcast %cst_29 : f32 to vector<8x128xf32>
      %c0_30 = arith.constant 0 : index
      %c0_31 = arith.constant 0 : index
      %c0_32 = arith.constant 0 : index
      %49 = vector.load %arg10[%c0_30, %c0_31, %c0_32] : memref<1x8x128xf32, #tpu.memory_space<vmem>>, vector<1x8x128xf32>
      %50 = vector.shape_cast %49 : vector<1x8x128xf32> to vector<8x128xf32>
      %51 = vector.shape_cast %48 : vector<8x128xf32> to vector<1x8x128xf32>
      tpu.vector_store %arg10[%c0_30, %c0_31, %c0_32], %51 {strides = array<i32>} : memref<1x8x128xf32, #tpu.memory_space<vmem>>, vector<1x8x128xf32>,
    } else {
    }
    %c0 = arith.constant 0 : index
    %c0_1 = arith.constant 0 : index
    %3 = vector.load %arg5[%c0, %c0_1] : memref<512x8xbf16, #tpu.memory_space<vmem>>, vector<512x8xbf16>
    %c0_2 = arith.constant 0 : index
    %c0_3 = arith.constant 0 : index
    %4 = vector.load %arg7[%c0_2, %c0_3] : memref<8x16xbf16, #tpu.memory_space<vmem>>, vector<8x16xbf16>
    %cst = arith.constant dense<0.000000e+00> : vector<512x16xf32>
    %5 = tpu.matmul %3, %4, %cst {dimension_numbers = #tpu.dot_dimension_numbers<[1], [0], [0], [1], [0, 0, 1, 1], [], []>} : vector<512x8xbf16>, vector<8x16xbf16>, vector<512x16xf32> -> vector<512x16xf32>
    %c0_4 = arith.constant 0 : index
    %c0_5 = arith.constant 0 : index
    %6 = vector.load %arg6[%c0_4, %c0_5] : memref<1x16xf32, #tpu.memory_space<vmem>>, vector<1x16xf32>
    %7 = vector.broadcast %6 : vector<1x16xf32> to vector<512x16xf32>
    %8 = arith.addf %5, %7 : vector<512x16xf32>
    %cst_6 = arith.constant 0.000000e+00 : f32
    %9 = vector.broadcast %cst_6 : f32 to vector<512x16xf32>
    %10 = arith.cmpf ogt, %8, %9 : vector<512x16xf32>
    %cst_7 = arith.constant 0.000000e+00 : f32
    %11 = vector.broadcast %cst_7 : f32 to vector<512x16xf32>
    %12 = arith.select %10, %8, %11 : vector<512x16xi1>, vector<512x16xf32>
    %13 = math.absf %8 : vector<512x16xf32>
    %cst_8 = arith.constant 0.000000e+00 : f32
    %14 = vector.broadcast %cst_8 : f32 to vector<512x16xf32>
    %15 = arith.subf %14, %13 : vector<512x16xf32>
    %16 = math.exp %15 : vector<512x16xf32>
    %17 = math.log1p %16 : vector<512x16xf32>
    %18 = arith.addf %12, %17 : vector<512x16xf32>
    %cst_9 = arith.constant 0.693147182 : f32
    %19 = vector.broadcast %cst_9 : f32 to vector<512x16xf32>
    %20 = arith.subf %18, %19 : vector<512x16xf32>
    %21 = arith.truncf %20 : vector<512x16xf32> to vector<512x16xbf16>
    %c0_10 = arith.constant 0 : index
    %c0_11 = arith.constant 0 : index
    %22 = vector.load %arg8[%c0_10, %c0_11] : memref<16x128xbf16, #tpu.memory_space<vmem>>, vector<16x128xbf16>
    %cst_12 = arith.constant dense<0.000000e+00> : vector<512x128xf32>
    %23 = tpu.matmul %21, %22, %cst_12 {dimension_numbers = #tpu.dot_dimension_numbers<[1], [0], [0], [1], [0, 0, 1, 1], [], []>} : vector<512x16xbf16>, vector<16x128xbf16>, vector<512x128xf32> -> vector<512x128xf32>
    %c0_13 = arith.constant 0 : index
    %c0_14 = arith.constant 0 : index
    %24 = vector.load %arg3[%c0_13, %c0_14] : memref<512x100xbf16, #tpu.memory_space<vmem>>, vector<512x100xbf16>
    %25 = arith.extf %24 : vector<512x100xbf16> to vector<512x100xf32>
    %c0_15 = arith.constant 0 : index
    %c0_16 = arith.constant 0 : index
    %26 = vector.load %arg4[%c0_15, %c0_16] : memref<512x100xbf16, #tpu.memory_space<vmem>>, vector<512x100xbf16>
    %27 = arith.extf %26 : vector<512x100xbf16> to vector<512x100xf32>
    %28 = arith.mulf %25, %27 : vector<512x100xf32>
    %29 = arith.truncf %28 : vector<512x100xf32> to vector<512x100xbf16>
    %c0_17 = arith.constant 0 : index
    %c0_18 = arith.constant 0 : index
    %30 = vector.load %arg9[%c0_17, %c0_18] : memref<100x128xbf16, #tpu.memory_space<vmem>>, vector<100x128xbf16>
    %cst_19 = arith.constant dense<0.000000e+00> : vector<512x128xf32>
    %31 = tpu.matmul %29, %30, %cst_19 {dimension_numbers = #tpu.dot_dimension_numbers<[1], [0], [0], [1], [0, 0, 1, 1], [], []>} : vector<512x100xbf16>, vector<100x128xbf16>, vector<512x128xf32> -> vector<512x128xf32>
    %32 = arith.mulf %31, %23 : vector<512x128xf32>
    %33 = arith.truncf %32 : vector<512x128xf32> to vector<512x128xbf16>
    %c0_20 = arith.constant 0 : index
    %c0_21 = arith.constant 0 : index
    %34 = vector.load %arg2[%c0_20, %c0_21] : memref<1x512xi32, #tpu.memory_space<vmem>>, vector<1x512xi32>
    %35 = tpu.iota {dimensions = array<i32: 0>} : vector<8x512xi32>
    %36 = vector.broadcast %34 : vector<1x512xi32> to vector<8x512xi32>
    %37 = arith.cmpi eq, %35, %36 : vector<8x512xi32>
    %38 = arith.extui %37 : vector<8x512xi1> to vector<8x512xi32>
    %39 = arith.sitofp %38 : vector<8x512xi32> to vector<8x512xf32>
    %40 = arith.truncf %39 : vector<8x512xf32> to vector<8x512xbf16>
    %c0_22 = arith.constant 0 : index
    %c0_23 = arith.constant 0 : index
    %c0_24 = arith.constant 0 : index
    %41 = vector.load %arg10[%c0_22, %c0_23, %c0_24] : memref<1x8x128xf32, #tpu.memory_space<vmem>>, vector<1x8x128xf32>
    %42 = vector.shape_cast %41 : vector<1x8x128xf32> to vector<8x128xf32>
    %cst_25 = arith.constant dense<0.000000e+00> : vector<8x128xf32>
    %43 = tpu.matmul %40, %33, %cst_25 {dimension_numbers = #tpu.dot_dimension_numbers<[1], [0], [0], [1], [0, 0, 1, 1], [], []>} : vector<8x512xbf16>, vector<512x128xbf16>, vector<8x128xf32> -> vector<8x128xf32>
    %44 = arith.addf %42, %43 : vector<8x128xf32>
    %c0_26 = arith.constant 0 : index
    %c0_27 = arith.constant 0 : index
    %c0_28 = arith.constant 0 : index
    %45 = vector.load %arg10[%c0_26, %c0_27, %c0_28] : memref<1x8x128xf32, #tpu.memory_space<vmem>>, vector<1x8x128xf32>
    %46 = vector.shape_cast %45 : vector<1x8x128xf32> to vector<8x128xf32>
    %47 = vector.shape_cast %44 : vector<8x128xf32> to vector<1x8x128xf32>
    tpu.vector_store %arg10[%c0_26, %c0_27, %c0_28], %47 {strides = array<i32>} : memref<1x8x128xf32, #tpu.memory_space<vmem>>, vector<1x8x128xf32>,
    return
  }
  func.func @transform_0(%arg0: i32, %arg1: i32) -> (i32, i32) {
    %c1_i32 = arith.constant 1 : i32
    %0 = arith.muli %arg0, %c1_i32 : i32
    %1 = arith.addi %0, %arg1 : i32
    %c0_i32 = arith.constant 0 : i32
    %c0_i32_0 = arith.constant 0 : i32
    return %c0_i32, %1 : i32, i32
  }
  func.func @transform_1(%arg0: i32, %arg1: i32) -> (i32, i32) {
    %c1_i32 = arith.constant 1 : i32
    %0 = arith.muli %arg0, %c1_i32 : i32
    %1 = arith.addi %0, %arg1 : i32
    %c0_i32 = arith.constant 0 : i32
    %c0_i32_0 = arith.constant 0 : i32
    return %1, %c0_i32 : i32, i32
  }
  func.func @transform_2(%arg0: i32, %arg1: i32) -> (i32, i32) {
    %c1_i32 = arith.constant 1 : i32
    %0 = arith.muli %arg0, %c1_i32 : i32
    %1 = arith.addi %0, %arg1 : i32
    %c0_i32 = arith.constant 0 : i32
    %c0_i32_0 = arith.constant 0 : i32
    return %1, %c0_i32 : i32, i32
  }
  func.func @transform_3(%arg0: i32, %arg1: i32) -> (i32, i32) {
    %c1_i32 = arith.constant 1 : i32
    %0 = arith.muli %arg0, %c1_i32 : i32
    %1 = arith.addi %0, %arg1 : i32
    %c0_i32 = arith.constant 0 : i32
    %c0_i32_0 = arith.constant 0 : i32
    return %1, %c0_i32 : i32, i32
  }
  func.func @transform_4(%arg0: i32, %arg1: i32) -> (i32, i32) {
    %c0_i32 = arith.constant 0 : i32
    %c0_i32_0 = arith.constant 0 : i32
    %c0_i32_1 = arith.constant 0 : i32
    return %c0_i32, %c0_i32_0 : i32, i32
  }
  func.func @transform_5(%arg0: i32, %arg1: i32) -> (i32, i32) {
    %c0_i32 = arith.constant 0 : i32
    %c0_i32_0 = arith.constant 0 : i32
    %c0_i32_1 = arith.constant 0 : i32
    return %c0_i32, %c0_i32_0 : i32, i32
  }
  func.func @transform_6(%arg0: i32, %arg1: i32) -> (i32, i32) {
    %c0_i32 = arith.constant 0 : i32
    %c0_i32_0 = arith.constant 0 : i32
    %c0_i32_1 = arith.constant 0 : i32
    return %c0_i32, %c0_i32_0 : i32, i32
  }
  func.func @transform_7(%arg0: i32, %arg1: i32) -> (i32, i32) {
    %c0_i32 = arith.constant 0 : i32
    %c0_i32_0 = arith.constant 0 : i32
    %c0_i32_1 = arith.constant 0 : i32
    return %c0_i32, %c0_i32_0 : i32, i32
  }
  func.func @transform_8(%arg0: i32, %arg1: i32) -> (i32, i32, i32) {
    %c0_i32 = arith.constant 0 : i32
    %c0_i32_0 = arith.constant 0 : i32
    %c0_i32_1 = arith.constant 0 : i32
    return %arg0, %c0_i32, %c0_i32_0 : i32, i32, i32
  }
}

</mosaic_0001>

<llo_original>
// kernel: tpu_custom_call.1
$region0: #{tpu_custom_call.1}
  #allocation0 [shape = 'u32[]', space=smem, size = 0x4, offset = 0x4, fixed_abs, tag = 'smem constant byte address 0x4 - core index']
  #allocation1 [shape = 'u32[72,128]{1,0:T(1,128)}', space=vmem, size = 0x9000, scoped, tag = 'internal scratch']
  %s0 = inlined_call_operand.vmem [shape: s32[1,512], index: 0, kind: input, shape index: {}]
  %s1 = inlined_call_operand.vmem [shape: bf16[512,100], index: 1, kind: input, shape index: {}]
  %s2 = inlined_call_operand.vmem [shape: bf16[512,100], index: 2, kind: input, shape index: {}]
  %s3 = inlined_call_operand.vmem [shape: bf16[512,8], index: 3, kind: input, shape index: {}]
  %s4 = inlined_call_operand.vmem [shape: f32[1,16], index: 4, kind: input, shape index: {}]
  %s5 = inlined_call_operand.vmem [shape: bf16[8,16], index: 5, kind: input, shape index: {}]
  %s6 = inlined_call_operand.vmem [shape: bf16[16,128], index: 6, kind: input, shape index: {}]
  %s7 = inlined_call_operand.vmem [shape: bf16[100,128], index: 7, kind: input, shape index: {}]
  %s8 = inlined_call_operand.hbm [shape: f32[1,8,128], index: 8, kind: output, shape index: {}]
  %s9 = sld [smem:[#allocation0]]
  $region46: #{tpu_custom_call.1} parent=0
    _
  %s11 = ssub.s32 1, %s9
  %s12 = scalar_select 0, %s11, %s9
  $region1: #{tpu_custom_call.1} parent=0
    #allocation2 [shape = 'u8[4096]{0}', space=vmem, size = 0x1000, scoped, tag = 'output window, operand 0, single buffered']
    #allocation3 [shape = 's32[1]{0}', space=sflag, size = 0x4, scoped, tag = 'scoped memory for tpu_custom_call.1']
    %13 = vsyncpa [#allocation3], 0
    // Predicated region
    $region2: #{tpu_custom_call.1} parent=1 // pred_check
      _
    $region3: #{tpu_custom_call.1} parent=1 // pred_check_branch
      %15 = sbr.rel (0) target = $region5
    $region4: #{tpu_custom_call.1} parent=1 // pred_region
      %s16 = sadd.s32 0, 0
      %s17 = smul.u32 4, %s16
      %p18 = scmp.lt.s32.totalorder %s17, 3
      %s19 = scalar_select %p18, %s17, 3
      %s20 = scalar_lea.vmem %s0, %s19
      %s21 = sadd.s32 0, 0
      %s22 = smul.u32 4, %s21
    $region5: #{tpu_custom_call.1} parent=1 // pred_fallthru
      _
    // Predicated region
    $region6: #{tpu_custom_call.1} parent=1 // pred_check
      _
    $region7: #{tpu_custom_call.1} parent=1 // pred_check_branch
      %24 = sbr.rel (0) target = $region9
    $region8: #{tpu_custom_call.1} parent=1 // pred_region
      %s25 = sadd.s32 0, 0
      %s26 = smul.u32 64, %s25
      %p27 = scmp.lt.s32.totalorder %s26, 63
      %s28 = scalar_select %p27, %s26, 63
      %s29 = smul.addr %s28, 4
      %s30 = scalar_lea.vmem %s1, %s29
      %s31 = sadd.s32 0, 0
      %s32 = smul.u32 64, %s31
    $region9: #{tpu_custom_call.1} parent=1 // pred_fallthru
      _
    // Predicated region
    $region10: #{tpu_custom_call.1} parent=1 // pred_check
      _
    $region11: #{tpu_custom_call.1} parent=1 // pred_check_branch
      %34 = sbr.rel (0) target = $region13
    $region12: #{tpu_custom_call.1} parent=1 // pred_region
      %s35 = sadd.s32 0, 0
      %s36 = smul.u32 64, %s35
      %p37 = scmp.lt.s32.totalorder %s36, 63
      %s38 = scalar_select %p37, %s36, 63
      %s39 = smul.addr %s38, 4
      %s40 = scalar_lea.vmem %s2, %s39
      %s41 = sadd.s32 0, 0
      %s42 = smul.u32 64, %s41
    $region13: #{tpu_custom_call.1} parent=1 // pred_fallthru
      _
    // Predicated region
    $region14: #{tpu_custom_call.1} parent=1 // pred_check
      _
    $region15: #{tpu_custom_call.1} parent=1 // pred_check_branch
      %44 = sbr.rel (0) target = $region17
    $region16: #{tpu_custom_call.1} parent=1 // pred_region
      %s45 = sadd.s32 0, 0
      %s46 = smul.u32 64, %s45
      %p47 = scmp.lt.s32.totalorder %s46, 63
      %s48 = scalar_select %p47, %s46, 63
      %s49 = smul.addr %s48, 4
      %s50 = scalar_lea.vmem %s3, %s49
      %s51 = sadd.s32 0, 0
      %s52 = smul.u32 64, %s51
    $region17: #{tpu_custom_call.1} parent=1 // pred_fallthru
      _
    // Predicated region
    $region18: #{tpu_custom_call.1} parent=1 // pred_check
      _
    $region19: #{tpu_custom_call.1} parent=1 // pred_check_branch
      %54 = sbr.rel (0) target = $region21
    $region20: #{tpu_custom_call.1} parent=1 // pred_region
      _
    $region21: #{tpu_custom_call.1} parent=1 // pred_fallthru
      _
    // Predicated region
    $region22: #{tpu_custom_call.1} parent=1 // pred_check
      _
    $region23: #{tpu_custom_call.1} parent=1 // pred_check_branch
      %56 = sbr.rel (0) target = $region25
    $region24: #{tpu_custom_call.1} parent=1 // pred_region
      _
    $region25: #{tpu_custom_call.1} parent=1 // pred_fallthru
      _
    // Predicated region
    $region26: #{tpu_custom_call.1} parent=1 // pred_check
      _
    $region27: #{tpu_custom_call.1} parent=1 // pred_check_branch
      %58 = sbr.rel (0) target = $region29
    $region28: #{tpu_custom_call.1} parent=1 // pred_region
      _
    $region29: #{tpu_custom_call.1} parent=1 // pred_fallthru
      _
    // Predicated region
    $region30: #{tpu_custom_call.1} parent=1 // pred_check
      _
    $region31: #{tpu_custom_call.1} parent=1 // pred_check_branch
      %60 = sbr.rel (0) target = $region33
    $region32: #{tpu_custom_call.1} parent=1 // pred_region
      _
    $region33: #{tpu_custom_call.1} parent=1 // pred_fallthru
      _
    %s61 = sadd.s32 0, 0
    %s62 = smul.u32 4, %s61
    %p63 = scmp.lt.s32.totalorder %s62, 3
    %s64 = scalar_select %p63, %s62, 3
    %s65 = scalar_lea.vmem %s0, %s64
    %s66 = sadd.s32 0, 0
    %s67 = smul.u32 64, %s66
    %p68 = scmp.lt.s32.totalorder %s67, 63
    %s69 = scalar_select %p68, %s67, 63
    %s70 = smul.addr %s69, 4
    %s71 = scalar_lea.vmem %s1, %s70
    %s72 = sadd.s32 0, 0
    %s73 = smul.u32 64, %s72
    %p74 = scmp.lt.s32.totalorder %s73, 63
    %s75 = scalar_select %p74, %s73, 63
    %s76 = smul.addr %s75, 4
    %s77 = scalar_lea.vmem %s2, %s76
    %s78 = sadd.s32 0, 0
    %s79 = smul.u32 64, %s78
    %p80 = scmp.lt.s32.totalorder %s79, 63
    %s81 = scalar_select %p80, %s79, 63
    %s82 = smul.addr %s81, 4
    %s83 = scalar_lea.vmem %s3, %s82
    %s84 = sadd.s32 0, 0
    %s85 = smul.u32 4, %s84
    %p86 = scmp.lt.s32.totalorder %s85, 3
    %s87 = scalar_select %p86, %s85, 3
    %s88 = scalar_lea.vmem %s0, %s87
    %s89 = sadd.s32 0, 0
    %s90 = smul.u32 4, %s89
    %s91 = sadd.s32 0, 0
    %s92 = smul.u32 64, %s91
    %p93 = scmp.lt.s32.totalorder %s92, 63
    %s94 = scalar_select %p93, %s92, 63
    %s95 = smul.addr %s94, 4
    %s96 = scalar_lea.vmem %s1, %s95
    %s97 = sadd.s32 0, 0
    %s98 = smul.u32 64, %s97
    %s99 = sadd.s32 0, 0
    %s100 = smul.u32 64, %s99
    %p101 = scmp.lt.s32.totalorder %s100, 63
    %s102 = scalar_select %p101, %s100, 63
    %s103 = smul.addr %s102, 4
    %s104 = scalar_lea.vmem %s2, %s103
    %s105 = sadd.s32 0, 0
    %s106 = smul.u32 64, %s105
    %s107 = sadd.s32 0, 0
    %s108 = smul.u32 64, %s107
    %p109 = scmp.lt.s32.totalorder %s108, 63
    %s110 = scalar_select %p109, %s108, 63
    %s111 = smul.addr %s110, 4
    %s112 = scalar_lea.vmem %s3, %s111
    %s113 = sadd.s32 0, 0
    %s114 = smul.u32 64, %s113
    %p116 = scmp.eq.s32.totalorder 0, 0
    // Predicated region
    $region34: #{tpu_custom_call.1} parent=1 // pred_check
      %p117 = pneg %p116
    $region35: #{tpu_custom_call.1} parent=1 // pred_check_branch
      %119 = sbr.rel (%p117) target = $region37
    $region36: #{tpu_custom_call.1} parent=1 // pred_region
      %120 = vst [vmem:[#allocation2] sm:$0xff] 0.0
    $region37: #{tpu_custom_call.1} parent=1 // pred_fallthru
      _
    %v121 = vld [vmem:[%s112] sm:$0xf]
    %v122 = vld [vmem:[%s112 + $0x4] sm:$0xf]
    %v123 = vld [vmem:[%s112 + $0x8] sm:$0xf]
    %v124 = vld [vmem:[%s112 + $0xc] sm:$0xf]
    %v125 = vld [vmem:[%s112 + $0x10] sm:$0xf]
    %v126 = vld [vmem:[%s112 + $0x14] sm:$0xf]
    %v127 = vld [vmem:[%s112 + $0x18] sm:$0xf]
    %v128 = vld [vmem:[%s112 + $0x1c] sm:$0xf]
    %v129 = vld [vmem:[%s112 + $0x20] sm:$0xf]
    %v130 = vld [vmem:[%s112 + $0x24] sm:$0xf]
    %v131 = vld [vmem:[%s112 + $0x28] sm:$0xf]
    %v132 = vld [vmem:[%s112 + $0x2c] sm:$0xf]
    %v133 = vld [vmem:[%s112 + $0x30] sm:$0xf]
    %v134 = vld [vmem:[%s112 + $0x34] sm:$0xf]
    %v135 = vld [vmem:[%s112 + $0x38] sm:$0xf]
    %v136 = vld [vmem:[%s112 + $0x3c] sm:$0xf]
    %v137 = vld [vmem:[%s112 + $0x40] sm:$0xf]
    %v138 = vld [vmem:[%s112 + $0x44] sm:$0xf]
    %v139 = vld [vmem:[%s112 + $0x48] sm:$0xf]
    %v140 = vld [vmem:[%s112 + $0x4c] sm:$0xf]
    %v141 = vld [vmem:[%s112 + $0x50] sm:$0xf]
    %v142 = vld [vmem:[%s112 + $0x54] sm:$0xf]
    %v143 = vld [vmem:[%s112 + $0x58] sm:$0xf]
    %v144 = vld [vmem:[%s112 + $0x5c] sm:$0xf]
    %v145 = vld [vmem:[%s112 + $0x60] sm:$0xf]
    %v146 = vld [vmem:[%s112 + $0x64] sm:$0xf]
    %v147 = vld [vmem:[%s112 + $0x68] sm:$0xf]
    %v148 = vld [vmem:[%s112 + $0x6c] sm:$0xf]
    %v149 = vld [vmem:[%s112 + $0x70] sm:$0xf]
    %v150 = vld [vmem:[%s112 + $0x74] sm:$0xf]
    %v151 = vld [vmem:[%s112 + $0x78] sm:$0xf]
    %v152 = vld [vmem:[%s112 + $0x7c] sm:$0xf]
    %v153 = vld [vmem:[%s112 + $0x80] sm:$0xf]
    %v154 = vld [vmem:[%s112 + $0x84] sm:$0xf]
    %v155 = vld [vmem:[%s112 + $0x88] sm:$0xf]
    %v156 = vld [vmem:[%s112 + $0x8c] sm:$0xf]
    %v157 = vld [vmem:[%s112 + $0x90] sm:$0xf]
    %v158 = vld [vmem:[%s112 + $0x94] sm:$0xf]
    %v159 = vld [vmem:[%s112 + $0x98] sm:$0xf]
    %v160 = vld [vmem:[%s112 + $0x9c] sm:$0xf]
    %v161 = vld [vmem:[%s112 + $0xa0] sm:$0xf]
    %v162 = vld [vmem:[%s112 + $0xa4] sm:$0xf]
    %v163 = vld [vmem:[%s112 + $0xa8] sm:$0xf]
    %v164 = vld [vmem:[%s112 + $0xac] sm:$0xf]
    %v165 = vld [vmem:[%s112 + $0xb0] sm:$0xf]
    %v166 = vld [vmem:[%s112 + $0xb4] sm:$0xf]
    %v167 = vld [vmem:[%s112 + $0xb8] sm:$0xf]
    %v168 = vld [vmem:[%s112 + $0xbc] sm:$0xf]
    %v169 = vld [vmem:[%s112 + $0xc0] sm:$0xf]
    %v170 = vld [vmem:[%s112 + $0xc4] sm:$0xf]
    %v171 = vld [vmem:[%s112 + $0xc8] sm:$0xf]
    %v172 = vld [vmem:[%s112 + $0xcc] sm:$0xf]
    %v173 = vld [vmem:[%s112 + $0xd0] sm:$0xf]
    %v174 = vld [vmem:[%s112 + $0xd4] sm:$0xf]
    %v175 = vld [vmem:[%s112 + $0xd8] sm:$0xf]
    %v176 = vld [vmem:[%s112 + $0xdc] sm:$0xf]
    %v177 = vld [vmem:[%s112 + $0xe0] sm:$0xf]
    %v178 = vld [vmem:[%s112 + $0xe4] sm:$0xf]
    %v179 = vld [vmem:[%s112 + $0xe8] sm:$0xf]
    %v180 = vld [vmem:[%s112 + $0xec] sm:$0xf]
    %v181 = vld [vmem:[%s112 + $0xf0] sm:$0xf]
    %v182 = vld [vmem:[%s112 + $0xf4] sm:$0xf]
    %v183 = vld [vmem:[%s112 + $0xf8] sm:$0xf]
    %v184 = vld [vmem:[%s112 + $0xfc] sm:$0xf]
    %v185 = vld [vmem:[%s5] sm:$0xf]
    %v186 = vld [vmem:[%s4] sm:$0x1]
    %v188 = vperm.slane %v186, 0
    %v254 = vunpack.c.l.b16 %v121
    %v255 = vunpack.c.l.b16 %v122
    %v256 = vunpack.c.l.b16 %v123
    %v257 = vunpack.c.l.b16 %v124
    %v258 = vunpack.c.l.b16 %v125
    %v259 = vunpack.c.l.b16 %v126
    %v260 = vunpack.c.l.b16 %v127
    %v261 = vunpack.c.l.b16 %v128
    %v262 = vunpack.c.l.b16 %v129
    %v263 = vunpack.c.l.b16 %v130
    %v264 = vunpack.c.l.b16 %v131
    %v265 = vunpack.c.l.b16 %v132
    %v266 = vunpack.c.l.b16 %v133
    %v267 = vunpack.c.l.b16 %v134
    %v268 = vunpack.c.l.b16 %v135
    %v269 = vunpack.c.l.b16 %v136
    %v270 = vunpack.c.l.b16 %v137
    %v271 = vunpack.c.l.b16 %v138
    %v272 = vunpack.c.l.b16 %v139
    %v273 = vunpack.c.l.b16 %v140
    %v274 = vunpack.c.l.b16 %v141
    %v275 = vunpack.c.l.b16 %v142
    %v276 = vunpack.c.l.b16 %v143
    %v277 = vunpack.c.l.b16 %v144
    %v278 = vunpack.c.l.b16 %v145
    %v279 = vunpack.c.l.b16 %v146
    %v280 = vunpack.c.l.b16 %v147
    %v281 = vunpack.c.l.b16 %v148
    %v282 = vunpack.c.l.b16 %v149
    %v283 = vunpack.c.l.b16 %v150
    %v284 = vunpack.c.l.b16 %v151
    %v285 = vunpack.c.l.b16 %v152
    %v286 = vunpack.c.l.b16 %v153
    %v287 = vunpack.c.l.b16 %v154
    %v288 = vunpack.c.l.b16 %v155
    %v289 = vunpack.c.l.b16 %v156
    %v290 = vunpack.c.l.b16 %v157
    %v291 = vunpack.c.l.b16 %v158
    %v292 = vunpack.c.l.b16 %v159
    %v293 = vunpack.c.l.b16 %v160
    %v294 = vunpack.c.l.b16 %v161
    %v295 = vunpack.c.l.b16 %v162
    %v296 = vunpack.c.l.b16 %v163
    %v297 = vunpack.c.l.b16 %v164
    %v298 = vunpack.c.l.b16 %v165
    %v299 = vunpack.c.l.b16 %v166
    %v300 = vunpack.c.l.b16 %v167
    %v301 = vunpack.c.l.b16 %v168
    %v302 = vunpack.c.l.b16 %v169
    %v303 = vunpack.c.l.b16 %v170
    %v304 = vunpack.c.l.b16 %v171
    %v305 = vunpack.c.l.b16 %v172
    %v306 = vunpack.c.l.b16 %v173
    %v307 = vunpack.c.l.b16 %v174
    %v308 = vunpack.c.l.b16 %v175
    %v309 = vunpack.c.l.b16 %v176
    %v310 = vunpack.c.l.b16 %v177
    %v311 = vunpack.c.l.b16 %v178
    %v312 = vunpack.c.l.b16 %v179
    %v313 = vunpack.c.l.b16 %v180
    %v314 = vunpack.c.l.b16 %v181
    %v315 = vunpack.c.l.b16 %v182
    %v316 = vunpack.c.l.b16 %v183
    %v317 = vunpack.c.l.b16 %v184
    %v318 = vpack.c.b16 %v255, %v254
    %v319 = vpack.c.b16 %v257, %v256
    %v320 = vpack.c.b16 %v259, %v258
    %v321 = vpack.c.b16 %v261, %v260
    %v322 = vpack.c.b16 %v263, %v262
    %v323 = vpack.c.b16 %v265, %v264
    %v324 = vpack.c.b16 %v267, %v266
    %v325 = vpack.c.b16 %v269, %v268
    %v326 = vpack.c.b16 %v271, %v270
    %v327 = vpack.c.b16 %v273, %v272
    %v328 = vpack.c.b16 %v275, %v274
    %v329 = vpack.c.b16 %v277, %v276
    %v330 = vpack.c.b16 %v279, %v278
    %v331 = vpack.c.b16 %v281, %v280
    %v332 = vpack.c.b16 %v283, %v282
    %v333 = vpack.c.b16 %v285, %v284
    %v334 = vpack.c.b16 %v287, %v286
    %v335 = vpack.c.b16 %v289, %v288
    %v336 = vpack.c.b16 %v291, %v290
    %v337 = vpack.c.b16 %v293, %v292
    %v338 = vpack.c.b16 %v295, %v294
    %v339 = vpack.c.b16 %v297, %v296
    %v340 = vpack.c.b16 %v299, %v298
    %v341 = vpack.c.b16 %v301, %v300
    %v342 = vpack.c.b16 %v303, %v302
    %v343 = vpack.c.b16 %v305, %v304
    %v344 = vpack.c.b16 %v307, %v306
    %v345 = vpack.c.b16 %v309, %v308
    %v346 = vpack.c.b16 %v311, %v310
    %v347 = vpack.c.b16 %v313, %v312
    %v348 = vpack.c.b16 %v315, %v314
    %v349 = vpack.c.b16 %v317, %v316
    %vm350 = vcmask 64512
    %v352 = vsel %vm350, %v318, 0
    %v355 = vsel %vm350, %v319, 0
    %v358 = vsel %vm350, %v320, 0
    %v361 = vsel %vm350, %v321, 0
    %v364 = vsel %vm350, %v322, 0
    %v367 = vsel %vm350, %v323, 0
    %v370 = vsel %vm350, %v324, 0
    %v373 = vsel %vm350, %v325, 0
    %v376 = vsel %vm350, %v326, 0
    %v379 = vsel %vm350, %v327, 0
    %v382 = vsel %vm350, %v328, 0
    %v385 = vsel %vm350, %v329, 0
    %v388 = vsel %vm350, %v330, 0
    %v391 = vsel %vm350, %v331, 0
    %v394 = vsel %vm350, %v332, 0
    %v397 = vsel %vm350, %v333, 0
    %v400 = vsel %vm350, %v334, 0
    %v403 = vsel %vm350, %v335, 0
    %v406 = vsel %vm350, %v336, 0
    %v409 = vsel %vm350, %v337, 0
    %v412 = vsel %vm350, %v338, 0
    %v415 = vsel %vm350, %v339, 0
    %v418 = vsel %vm350, %v340, 0
    %v421 = vsel %vm350, %v341, 0
    %v424 = vsel %vm350, %v342, 0
    %v427 = vsel %vm350, %v343, 0
    %v430 = vsel %vm350, %v344, 0
    %v433 = vsel %vm350, %v345, 0
    %v436 = vsel %vm350, %v346, 0
    %v439 = vsel %vm350, %v347, 0
    %v442 = vsel %vm350, %v348, 0
    %v445 = vsel %vm350, %v349, 0
    %vm447 = vcmask 1043456
    %v449 = vsel %vm447, %v185, 0
    %451 = vmatpush.bf16.msra.mxu0 0
    %452 = vmatpush.bf16.msra.mxu0 0
    %453 = vmatpush.bf16.msra.mxu0 0
    %454 = vmatpush.bf16.msra.mxu0 0
    %455 = vmatpush.bf16.msra.mxu0 0
    %456 = vmatpush.bf16.msra.mxu0 0
    %457 = vmatpush.bf16.msra.mxu0 0
    %458 = vmatpush.bf16.msra.mxu0 %v449
    %459 = vmatmul.bf16.gmra.mxu0 %v352
    %v460 = vpop.f32.mrf.mxu0
    %v461 = vadd.f32 %v188, %v460
    %v462 = vpop.f32.mrf.mxu0
    %v463 = vadd.f32 %v188, %v462
    %464 = vmatmul.bf16.gmra.mxu0 %v355
    %v465 = vpop.f32.mrf.mxu0
    %v466 = vadd.f32 %v188, %v465
    %v467 = vpop.f32.mrf.mxu0
    %v468 = vadd.f32 %v188, %v467
    %469 = vmatmul.bf16.gmra.mxu0 %v358
    %v470 = vpop.f32.mrf.mxu0
    %v471 = vadd.f32 %v188, %v470
    %v472 = vpop.f32.mrf.mxu0
    %v473 = vadd.f32 %v188, %v472
    %474 = vmatmul.bf16.gmra.mxu0 %v361
    %v475 = vpop.f32.mrf.mxu0
    %v476 = vadd.f32 %v188, %v475
    %v477 = vpop.f32.mrf.mxu0
    %v478 = vadd.f32 %v188, %v477
    %479 = vmatmul.bf16.gmra.mxu0 %v364
    %v480 = vpop.f32.mrf.mxu0
    %v481 = vadd.f32 %v188, %v480
    %v482 = vpop.f32.mrf.mxu0
    %v483 = vadd.f32 %v188, %v482
    %484 = vmatmul.bf16.gmra.mxu0 %v367
    %v485 = vpop.f32.mrf.mxu0
    %v486 = vadd.f32 %v188, %v485
    %v487 = vpop.f32.mrf.mxu0
    %v488 = vadd.f32 %v188, %v487
    %489 = vmatmul.bf16.gmra.mxu0 %v370
    %v490 = vpop.f32.mrf.mxu0
    %v491 = vadd.f32 %v188, %v490
    %v492 = vpop.f32.mrf.mxu0
    %v493 = vadd.f32 %v188, %v492
    %494 = vmatmul.bf16.gmra.mxu0 %v373
    %v495 = vpop.f32.mrf.mxu0
    %v496 = vadd.f32 %v188, %v495
    %v497 = vpop.f32.mrf.mxu0
    %v498 = vadd.f32 %v188, %v497
    %499 = vmatmul.bf16.gmra.mxu0 %v376
    %v500 = vpop.f32.mrf.mxu0
    %v501 = vadd.f32 %v188, %v500
    %v502 = vpop.f32.mrf.mxu0
    %v503 = vadd.f32 %v188, %v502
    %504 = vmatmul.bf16.gmra.mxu0 %v379
    %v505 = vpop.f32.mrf.mxu0
    %v506 = vadd.f32 %v188, %v505
    %v507 = vpop.f32.mrf.mxu0
    %v508 = vadd.f32 %v188, %v507
    %509 = vmatmul.bf16.gmra.mxu0 %v382
    %v510 = vpop.f32.mrf.mxu0
    %v511 = vadd.f32 %v188, %v510
    %v512 = vpop.f32.mrf.mxu0
    %v513 = vadd.f32 %v188, %v512
    %514 = vmatmul.bf16.gmra.mxu0 %v385
    %v515 = vpop.f32.mrf.mxu0
    %v516 = vadd.f32 %v188, %v515
    %v517 = vpop.f32.mrf.mxu0
    %v518 = vadd.f32 %v188, %v517
    %519 = vmatmul.bf16.gmra.mxu0 %v388
    %v520 = vpop.f32.mrf.mxu0
    %v521 = vadd.f32 %v188, %v520
    %v522 = vpop.f32.mrf.mxu0
    %v523 = vadd.f32 %v188, %v522
    %524 = vmatmul.bf16.gmra.mxu0 %v391
    %v525 = vpop.f32.mrf.mxu0
    %v526 = vadd.f32 %v188, %v525
    %v527 = vpop.f32.mrf.mxu0
    %v528 = vadd.f32 %v188, %v527
    %529 = vmatmul.bf16.gmra.mxu0 %v394
    %v530 = vpop.f32.mrf.mxu0
    %v531 = vadd.f32 %v188, %v530
    %v532 = vpop.f32.mrf.mxu0
    %v533 = vadd.f32 %v188, %v532
    %534 = vmatmul.bf16.gmra.mxu0 %v397
    %v535 = vpop.f32.mrf.mxu0
    %v536 = vadd.f32 %v188, %v535
    %v537 = vpop.f32.mrf.mxu0
    %v538 = vadd.f32 %v188, %v537
    %539 = vmatmul.bf16.gmra.mxu0 %v400
    %v540 = vpop.f32.mrf.mxu0
    %v541 = vadd.f32 %v188, %v540
    %v542 = vpop.f32.mrf.mxu0
    %v543 = vadd.f32 %v188, %v542
    %544 = vmatmul.bf16.gmra.mxu0 %v403
    %v545 = vpop.f32.mrf.mxu0
    %v546 = vadd.f32 %v188, %v545
    %v547 = vpop.f32.mrf.mxu0
    %v548 = vadd.f32 %v188, %v547
    %549 = vmatmul.bf16.gmra.mxu0 %v406
    %v550 = vpop.f32.mrf.mxu0
    %v551 = vadd.f32 %v188, %v550
    %v552 = vpop.f32.mrf.mxu0
    %v553 = vadd.f32 %v188, %v552
    %554 = vmatmul.bf16.gmra.mxu0 %v409
    %v555 = vpop.f32.mrf.mxu0
    %v556 = vadd.f32 %v188, %v555
    %v557 = vpop.f32.mrf.mxu0
    %v558 = vadd.f32 %v188, %v557
    %559 = vmatmul.bf16.gmra.mxu0 %v412
    %v560 = vpop.f32.mrf.mxu0
    %v561 = vadd.f32 %v188, %v560
    %v562 = vpop.f32.mrf.mxu0
    %v563 = vadd.f32 %v188, %v562
    %564 = vmatmul.bf16.gmra.mxu0 %v415
    %v565 = vpop.f32.mrf.mxu0
    %v566 = vadd.f32 %v188, %v565
    %v567 = vpop.f32.mrf.mxu0
    %v568 = vadd.f32 %v188, %v567
    %569 = vmatmul.bf16.gmra.mxu0 %v418
    %v570 = vpop.f32.mrf.mxu0
    %v571 = vadd.f32 %v188, %v570
    %v572 = vpop.f32.mrf.mxu0
    %v573 = vadd.f32 %v188, %v572
    %574 = vmatmul.bf16.gmra.mxu0 %v421
    %v575 = vpop.f32.mrf.mxu0
    %v576 = vadd.f32 %v188, %v575
    %v577 = vpop.f32.mrf.mxu0
    %v578 = vadd.f32 %v188, %v577
    %579 = vmatmul.bf16.gmra.mxu0 %v424
    %v580 = vpop.f32.mrf.mxu0
    %v581 = vadd.f32 %v188, %v580
    %v582 = vpop.f32.mrf.mxu0
    %v583 = vadd.f32 %v188, %v582
    %584 = vmatmul.bf16.gmra.mxu0 %v427
    %v585 = vpop.f32.mrf.mxu0
    %v586 = vadd.f32 %v188, %v585
    %v587 = vpop.f32.mrf.mxu0
    %v588 = vadd.f32 %v188, %v587
    %589 = vmatmul.bf16.gmra.mxu0 %v430
    %v590 = vpop.f32.mrf.mxu0
    %v591 = vadd.f32 %v188, %v590
    %v592 = vpop.f32.mrf.mxu0
    %v593 = vadd.f32 %v188, %v592
    %594 = vmatmul.bf16.gmra.mxu0 %v433
    %v595 = vpop.f32.mrf.mxu0
    %v596 = vadd.f32 %v188, %v595
    %v597 = vpop.f32.mrf.mxu0
    %v598 = vadd.f32 %v188, %v597
    %599 = vmatmul.bf16.gmra.mxu0 %v436
    %v600 = vpop.f32.mrf.mxu0
    %v601 = vadd.f32 %v188, %v600
    %v602 = vpop.f32.mrf.mxu0
    %v603 = vadd.f32 %v188, %v602
    %604 = vmatmul.bf16.gmra.mxu0 %v439
    %v605 = vpop.f32.mrf.mxu0
    %v606 = vadd.f32 %v188, %v605
    %v607 = vpop.f32.mrf.mxu0
    %v608 = vadd.f32 %v188, %v607
    %609 = vmatmul.bf16.gmra.mxu0 %v442
    %v610 = vpop.f32.mrf.mxu0
    %v611 = vadd.f32 %v188, %v610
    %v612 = vpop.f32.mrf.mxu0
    %v613 = vadd.f32 %v188, %v612
    %614 = vmatmul.bf16.gmra.mxu0 %v445
    %v615 = vpop.f32.mrf.mxu0
    %v616 = vadd.f32 %v188, %v615
    %v617 = vpop.f32.mrf.mxu0
    %v618 = vadd.f32 %v188, %v617
    %619 = vdwg.mxu0
    %vm620 = vcmp.gt.f32.partialorder %v461, 0.0
    %vm621 = vcmp.gt.f32.partialorder %v463, 0.0
    %vm622 = vcmp.gt.f32.partialorder %v466, 0.0
    %vm623 = vcmp.gt.f32.partialorder %v468, 0.0
    %vm624 = vcmp.gt.f32.partialorder %v471, 0.0
    %vm625 = vcmp.gt.f32.partialorder %v473, 0.0
    %vm626 = vcmp.gt.f32.partialorder %v476, 0.0
    %vm627 = vcmp.gt.f32.partialorder %v478, 0.0
    %vm628 = vcmp.gt.f32.partialorder %v481, 0.0
    %vm629 = vcmp.gt.f32.partialorder %v483, 0.0
    %vm630 = vcmp.gt.f32.partialorder %v486, 0.0
    %vm631 = vcmp.gt.f32.partialorder %v488, 0.0
    %vm632 = vcmp.gt.f32.partialorder %v491, 0.0
    %vm633 = vcmp.gt.f32.partialorder %v493, 0.0
    %vm634 = vcmp.gt.f32.partialorder %v496, 0.0
    %vm635 = vcmp.gt.f32.partialorder %v498, 0.0
    %vm636 = vcmp.gt.f32.partialorder %v501, 0.0
    %vm637 = vcmp.gt.f32.partialorder %v503, 0.0
    %vm638 = vcmp.gt.f32.partialorder %v506, 0.0
    %vm639 = vcmp.gt.f32.partialorder %v508, 0.0
    %vm640 = vcmp.gt.f32.partialorder %v511, 0.0
    %vm641 = vcmp.gt.f32.partialorder %v513, 0.0
    %vm642 = vcmp.gt.f32.partialorder %v516, 0.0
    %vm643 = vcmp.gt.f32.partialorder %v518, 0.0
    %vm644 = vcmp.gt.f32.partialorder %v521, 0.0
    %vm645 = vcmp.gt.f32.partialorder %v523, 0.0
    %vm646 = vcmp.gt.f32.partialorder %v526, 0.0
    %vm647 = vcmp.gt.f32.partialorder %v528, 0.0
    %vm648 = vcmp.gt.f32.partialorder %v531, 0.0
    %vm649 = vcmp.gt.f32.partialorder %v533, 0.0
    %vm650 = vcmp.gt.f32.partialorder %v536, 0.0
    %vm651 = vcmp.gt.f32.partialorder %v538, 0.0
    %vm652 = vcmp.gt.f32.partialorder %v541, 0.0
    %vm653 = vcmp.gt.f32.partialorder %v543, 0.0
    %vm654 = vcmp.gt.f32.partialorder %v546, 0.0
    %vm655 = vcmp.gt.f32.partialorder %v548, 0.0
    %vm656 = vcmp.gt.f32.partialorder %v551, 0.0
    %vm657 = vcmp.gt.f32.partialorder %v553, 0.0
    %vm658 = vcmp.gt.f32.partialorder %v556, 0.0
    %vm659 = vcmp.gt.f32.partialorder %v558, 0.0
    %vm660 = vcmp.gt.f32.partialorder %v561, 0.0
    %vm661 = vcmp.gt.f32.partialorder %v563, 0.0
    %vm662 = vcmp.gt.f32.partialorder %v566, 0.0
    %vm663 = vcmp.gt.f32.partialorder %v568, 0.0
    %vm664 = vcmp.gt.f32.partialorder %v571, 0.0
    %vm665 = vcmp.gt.f32.partialorder %v573, 0.0
    %vm666 = vcmp.gt.f32.partialorder %v576, 0.0
    %vm667 = vcmp.gt.f32.partialorder %v578, 0.0
    %vm668 = vcmp.gt.f32.partialorder %v581, 0.0
    %vm669 = vcmp.gt.f32.partialorder %v583, 0.0
    %vm670 = vcmp.gt.f32.partialorder %v586, 0.0
    %vm671 = vcmp.gt.f32.partialorder %v588, 0.0
    %vm672 = vcmp.gt.f32.partialorder %v591, 0.0
    %vm673 = vcmp.gt.f32.partialorder %v593, 0.0
    %vm674 = vcmp.gt.f32.partialorder %v596, 0.0
    %vm675 = vcmp.gt.f32.partialorder %v598, 0.0
    %vm676 = vcmp.gt.f32.partialorder %v601, 0.0
    %vm677 = vcmp.gt.f32.partialorder %v603, 0.0
    %vm678 = vcmp.gt.f32.partialorder %v606, 0.0
    %vm679 = vcmp.gt.f32.partialorder %v608, 0.0
    %vm680 = vcmp.gt.f32.partialorder %v611, 0.0
    %vm681 = vcmp.gt.f32.partialorder %v613, 0.0
    %vm682 = vcmp.gt.f32.partialorder %v616, 0.0
    %vm683 = vcmp.gt.f32.partialorder %v618, 0.0
    %v684 = vsel %vm620, %v461, 0.0
    %v685 = vsel %vm621, %v463, 0.0
    %v686 = vsel %vm622, %v466, 0.0
    %v687 = vsel %vm623, %v468, 0.0
    %v688 = vsel %vm624, %v471, 0.0
    %v689 = vsel %vm625, %v473, 0.0
    %v690 = vsel %vm626, %v476, 0.0
    %v691 = vsel %vm627, %v478, 0.0
    %v692 = vsel %vm628, %v481, 0.0
    %v693 = vsel %vm629, %v483, 0.0
    %v694 = vsel %vm630, %v486, 0.0
    %v695 = vsel %vm631, %v488, 0.0
    %v696 = vsel %vm632, %v491, 0.0
    %v697 = vsel %vm633, %v493, 0.0
    %v698 = vsel %vm634, %v496, 0.0
    %v699 = vsel %vm635, %v498, 0.0
    %v700 = vsel %vm636, %v501, 0.0
    %v701 = vsel %vm637, %v503, 0.0
    %v702 = vsel %vm638, %v506, 0.0
    %v703 = vsel %vm639, %v508, 0.0
    %v704 = vsel %vm640, %v511, 0.0
    %v705 = vsel %vm641, %v513, 0.0
    %v706 = vsel %vm642, %v516, 0.0
    %v707 = vsel %vm643, %v518, 0.0
    %v708 = vsel %vm644, %v521, 0.0
    %v709 = vsel %vm645, %v523, 0.0
    %v710 = vsel %vm646, %v526, 0.0
    %v711 = vsel %vm647, %v528, 0.0
    %v712 = vsel %vm648, %v531, 0.0
    %v713 = vsel %vm649, %v533, 0.0
    %v714 = vsel %vm650, %v536, 0.0
    %v715 = vsel %vm651, %v538, 0.0
    %v716 = vsel %vm652, %v541, 0.0
    %v717 = vsel %vm653, %v543, 0.0
    %v718 = vsel %vm654, %v546, 0.0
    %v719 = vsel %vm655, %v548, 0.0
    %v720 = vsel %vm656, %v551, 0.0
    %v721 = vsel %vm657, %v553, 0.0
    %v722 = vsel %vm658, %v556, 0.0
    %v723 = vsel %vm659, %v558, 0.0
    %v724 = vsel %vm660, %v561, 0.0
    %v725 = vsel %vm661, %v563, 0.0
    %v726 = vsel %vm662, %v566, 0.0
    %v727 = vsel %vm663, %v568, 0.0
    %v728 = vsel %vm664, %v571, 0.0
    %v729 = vsel %vm665, %v573, 0.0
    %v730 = vsel %vm666, %v576, 0.0
    %v731 = vsel %vm667, %v578, 0.0
    %v732 = vsel %vm668, %v581, 0.0
    %v733 = vsel %vm669, %v583, 0.0
    %v734 = vsel %vm670, %v586, 0.0
    %v735 = vsel %vm671, %v588, 0.0
    %v736 = vsel %vm672, %v591, 0.0
    %v737 = vsel %vm673, %v593, 0.0
    %v738 = vsel %vm674, %v596, 0.0
    %v739 = vsel %vm675, %v598, 0.0
    %v740 = vsel %vm676, %v601, 0.0
    %v741 = vsel %vm677, %v603, 0.0
    %v742 = vsel %vm678, %v606, 0.0
    %v743 = vsel %vm679, %v608, 0.0
    %v744 = vsel %vm680, %v611, 0.0
    %v745 = vsel %vm681, %v613, 0.0
    %v746 = vsel %vm682, %v616, 0.0
    %v747 = vsel %vm683, %v618, 0.0
    %v748 = vand.u32 2147483647, %v461
    %v749 = vand.u32 2147483647, %v463
    %v750 = vand.u32 2147483647, %v466
    %v751 = vand.u32 2147483647, %v468
    %v752 = vand.u32 2147483647, %v471
    %v753 = vand.u32 2147483647, %v473
    %v754 = vand.u32 2147483647, %v476
    %v755 = vand.u32 2147483647, %v478
    %v756 = vand.u32 2147483647, %v481
    %v757 = vand.u32 2147483647, %v483
    %v758 = vand.u32 2147483647, %v486
    %v759 = vand.u32 2147483647, %v488
    %v760 = vand.u32 2147483647, %v491
    %v761 = vand.u32 2147483647, %v493
    %v762 = vand.u32 2147483647, %v496
    %v763 = vand.u32 2147483647, %v498
    %v764 = vand.u32 2147483647, %v501
    %v765 = vand.u32 2147483647, %v503
    %v766 = vand.u32 2147483647, %v506
    %v767 = vand.u32 2147483647, %v508
    %v768 = vand.u32 2147483647, %v511
    %v769 = vand.u32 2147483647, %v513
    %v770 = vand.u32 2147483647, %v516
    %v771 = vand.u32 2147483647, %v518
    %v772 = vand.u32 2147483647, %v521
    %v773 = vand.u32 2147483647, %v523
    %v774 = vand.u32 2147483647, %v526
    %v775 = vand.u32 2147483647, %v528
    %v776 = vand.u32 2147483647, %v531
    %v777 = vand.u32 2147483647, %v533
    %v778 = vand.u32 2147483647, %v536
    %v779 = vand.u32 2147483647, %v538
    %v780 = vand.u32 2147483647, %v541
    %v781 = vand.u32 2147483647, %v543
    %v782 = vand.u32 2147483647, %v546
    %v783 = vand.u32 2147483647, %v548
    %v784 = vand.u32 2147483647, %v551
    %v785 = vand.u32 2147483647, %v553
    %v786 = vand.u32 2147483647, %v556
    %v787 = vand.u32 2147483647, %v558
    %v788 = vand.u32 2147483647, %v561
    %v789 = vand.u32 2147483647, %v563
    %v790 = vand.u32 2147483647, %v566
    %v791 = vand.u32 2147483647, %v568
    %v792 = vand.u32 2147483647, %v571
    %v793 = vand.u32 2147483647, %v573
    %v794 = vand.u32 2147483647, %v576
    %v795 = vand.u32 2147483647, %v578
    %v796 = vand.u32 2147483647, %v581
    %v797 = vand.u32 2147483647, %v583
    %v798 = vand.u32 2147483647, %v586
    %v799 = vand.u32 2147483647, %v588
    %v800 = vand.u32 2147483647, %v591
    %v801 = vand.u32 2147483647, %v593
    %v802 = vand.u32 2147483647, %v596
    %v803 = vand.u32 2147483647, %v598
    %v804 = vand.u32 2147483647, %v601
    %v805 = vand.u32 2147483647, %v603
    %v806 = vand.u32 2147483647, %v606
    %v807 = vand.u32 2147483647, %v608
    %v808 = vand.u32 2147483647, %v611
    %v809 = vand.u32 2147483647, %v613
    %v810 = vand.u32 2147483647, %v616
    %v811 = vand.u32 2147483647, %v618
    %v812 = vsub.f32 0.0, %v748
    %v813 = vsub.f32 0.0, %v749
    %v814 = vsub.f32 0.0, %v750
    %v815 = vsub.f32 0.0, %v751
    %v816 = vsub.f32 0.0, %v752
    %v817 = vsub.f32 0.0, %v753
    %v818 = vsub.f32 0.0, %v754
    %v819 = vsub.f32 0.0, %v755
    %v820 = vsub.f32 0.0, %v756
    %v821 = vsub.f32 0.0, %v757
    %v822 = vsub.f32 0.0, %v758
    %v823 = vsub.f32 0.0, %v759
    %v824 = vsub.f32 0.0, %v760
    %v825 = vsub.f32 0.0, %v761
    %v826 = vsub.f32 0.0, %v762
    %v827 = vsub.f32 0.0, %v763
    %v828 = vsub.f32 0.0, %v764
    %v829 = vsub.f32 0.0, %v765
    %v830 = vsub.f32 0.0, %v766
    %v831 = vsub.f32 0.0, %v767
    %v832 = vsub.f32 0.0, %v768
    %v833 = vsub.f32 0.0, %v769
    %v834 = vsub.f32 0.0, %v770
    %v835 = vsub.f32 0.0, %v771
    %v836 = vsub.f32 0.0, %v772
    %v837 = vsub.f32 0.0, %v773
    %v838 = vsub.f32 0.0, %v774
    %v839 = vsub.f32 0.0, %v775
    %v840 = vsub.f32 0.0, %v776
    %v841 = vsub.f32 0.0, %v777
    %v842 = vsub.f32 0.0, %v778
    %v843 = vsub.f32 0.0, %v779
    %v844 = vsub.f32 0.0, %v780
    %v845 = vsub.f32 0.0, %v781
    %v846 = vsub.f32 0.0, %v782
    %v847 = vsub.f32 0.0, %v783
    %v848 = vsub.f32 0.0, %v784
    %v849 = vsub.f32 0.0, %v785
    %v850 = vsub.f32 0.0, %v786
    %v851 = vsub.f32 0.0, %v787
    %v852 = vsub.f32 0.0, %v788
    %v853 = vsub.f32 0.0, %v789
    %v854 = vsub.f32 0.0, %v790
    %v855 = vsub.f32 0.0, %v791
    %v856 = vsub.f32 0.0, %v792
    %v857 = vsub.f32 0.0, %v793
    %v858 = vsub.f32 0.0, %v794
    %v859 = vsub.f32 0.0, %v795
    %v860 = vsub.f32 0.0, %v796
    %v861 = vsub.f32 0.0, %v797
    %v862 = vsub.f32 0.0, %v798
    %v863 = vsub.f32 0.0, %v799
    %v864 = vsub.f32 0.0, %v800
    %v865 = vsub.f32 0.0, %v801
    %v866 = vsub.f32 0.0, %v802
    %v867 = vsub.f32 0.0, %v803
    %v868 = vsub.f32 0.0, %v804
    %v869 = vsub.f32 0.0, %v805
    %v870 = vsub.f32 0.0, %v806
    %v871 = vsub.f32 0.0, %v807
    %v872 = vsub.f32 0.0, %v808
    %v873 = vsub.f32 0.0, %v809
    %v874 = vsub.f32 0.0, %v810
    %v875 = vsub.f32 0.0, %v811
    %v876 = vmul.f32 %v812, 1.442695
    %v877 = vpow.pop %v876
    %v878 = vmul.f32 %v813, 1.442695
    %v879 = vpow.pop %v878
    %v880 = vmul.f32 %v814, 1.442695
    %v881 = vpow.pop %v880
    %v882 = vmul.f32 %v815, 1.442695
    %v883 = vpow.pop %v882
    %v884 = vmul.f32 %v816, 1.442695
    %v885 = vpow.pop %v884
    %v886 = vmul.f32 %v817, 1.442695
    %v887 = vpow.pop %v886
    %v888 = vmul.f32 %v818, 1.442695
    %v889 = vpow.pop %v888
    %v890 = vmul.f32 %v819, 1.442695
    %v891 = vpow.pop %v890
    %v892 = vmul.f32 %v820, 1.442695
    %v893 = vpow.pop %v892
    %v894 = vmul.f32 %v821, 1.442695
    %v895 = vpow.pop %v894
    %v896 = vmul.f32 %v822, 1.442695
    %v897 = vpow.pop %v896
    %v898 = vmul.f32 %v823, 1.442695
    %v899 = vpow.pop %v898
    %v900 = vmul.f32 %v824, 1.442695
    %v901 = vpow.pop %v900
    %v902 = vmul.f32 %v825, 1.442695
    %v903 = vpow.pop %v902
    %v904 = vmul.f32 %v826, 1.442695
    %v905 = vpow.pop %v904
    %v906 = vmul.f32 %v827, 1.442695
    %v907 = vpow.pop %v906
    %v908 = vmul.f32 %v828, 1.442695
    %v909 = vpow.pop %v908
    %v910 = vmul.f32 %v829, 1.442695
    %v911 = vpow.pop %v910
    %v912 = vmul.f32 %v830, 1.442695
    %v913 = vpow.pop %v912
    %v914 = vmul.f32 %v831, 1.442695
    %v915 = vpow.pop %v914
    %v916 = vmul.f32 %v832, 1.442695
    %v917 = vpow.pop %v916
    %v918 = vmul.f32 %v833, 1.442695
    %v919 = vpow.pop %v918
    %v920 = vmul.f32 %v834, 1.442695
    %v921 = vpow.pop %v920
    %v922 = vmul.f32 %v835, 1.442695
    %v923 = vpow.pop %v922
    %v924 = vmul.f32 %v836, 1.442695
    %v925 = vpow.pop %v924
    %v926 = vmul.f32 %v837, 1.442695
    %v927 = vpow.pop %v926
    %v928 = vmul.f32 %v838, 1.442695
    %v929 = vpow.pop %v928
    %v930 = vmul.f32 %v839, 1.442695
    %v931 = vpow.pop %v930
    %v932 = vmul.f32 %v840, 1.442695
    %v933 = vpow.pop %v932
    %v934 = vmul.f32 %v841, 1.442695
    %v935 = vpow.pop %v934
    %v936 = vmul.f32 %v842, 1.442695
    %v937 = vpow.pop %v936
    %v938 = vmul.f32 %v843, 1.442695
    %v939 = vpow.pop %v938
    %v940 = vmul.f32 %v844, 1.442695
    %v941 = vpow.pop %v940
    %v942 = vmul.f32 %v845, 1.442695
    %v943 = vpow.pop %v942
    %v944 = vmul.f32 %v846, 1.442695
    %v945 = vpow.pop %v944
    %v946 = vmul.f32 %v847, 1.442695
    %v947 = vpow.pop %v946
    %v948 = vmul.f32 %v848, 1.442695
    %v949 = vpow.pop %v948
    %v950 = vmul.f32 %v849, 1.442695
    %v951 = vpow.pop %v950
    %v952 = vmul.f32 %v850, 1.442695
    %v953 = vpow.pop %v952
    %v954 = vmul.f32 %v851, 1.442695
    %v955 = vpow.pop %v954
    %v956 = vmul.f32 %v852, 1.442695
    %v957 = vpow.pop %v956
    %v958 = vmul.f32 %v853, 1.442695
    %v959 = vpow.pop %v958
    %v960 = vmul.f32 %v854, 1.442695
    %v961 = vpow.pop %v960
    %v962 = vmul.f32 %v855, 1.442695
    %v963 = vpow.pop %v962
    %v964 = vmul.f32 %v856, 1.442695
    %v965 = vpow.pop %v964
    %v966 = vmul.f32 %v857, 1.442695
    %v967 = vpow.pop %v966
    %v968 = vmul.f32 %v858, 1.442695
    %v969 = vpow.pop %v968
    %v970 = vmul.f32 %v859, 1.442695
    %v971 = vpow.pop %v970
    %v972 = vmul.f32 %v860, 1.442695
    %v973 = vpow.pop %v972
    %v974 = vmul.f32 %v861, 1.442695
    %v975 = vpow.pop %v974
    %v976 = vmul.f32 %v862, 1.442695
    %v977 = vpow.pop %v976
    %v978 = vmul.f32 %v863, 1.442695
    %v979 = vpow.pop %v978
    %v980 = vmul.f32 %v864, 1.442695
    %v981 = vpow.pop %v980
    %v982 = vmul.f32 %v865, 1.442695
    %v983 = vpow.pop %v982
    %v984 = vmul.f32 %v866, 1.442695
    %v985 = vpow.pop %v984
    %v986 = vmul.f32 %v867, 1.442695
    %v987 = vpow.pop %v986
    %v988 = vmul.f32 %v868, 1.442695
    %v989 = vpow.pop %v988
    %v990 = vmul.f32 %v869, 1.442695
    %v991 = vpow.pop %v990
    %v992 = vmul.f32 %v870, 1.442695
    %v993 = vpow.pop %v992
    %v994 = vmul.f32 %v871, 1.442695
    %v995 = vpow.pop %v994
    %v996 = vmul.f32 %v872, 1.442695
    %v997 = vpow.pop %v996
    %v998 = vmul.f32 %v873, 1.442695
    %v999 = vpow.pop %v998
    %v1000 = vmul.f32 %v874, 1.442695
    %v1001 = vpow.pop %v1000
    %v1002 = vmul.f32 %v875, 1.442695
    %v1003 = vpow.pop %v1002
    %v1004 = vadd.f32 %v877, 1.0
    %v1005 = vlog2.pop %v1004
    %v1006 = vmul.f32 %v1005, 0.6931472
    %v1007 = vmul.f32 -0.5, %v877
    %v1008 = vadd.f32 %v1007, 1.0
    %v1009 = vmul.f32 %v1008, %v877
    %v1010 = vand.u32 2147483647, %v877
    %vm1011 = vcmp.lt.f32.partialorder %v1010, 0.0004427343
    %v1012 = vsel %vm1011, %v1009, %v1006
    %v1013 = vadd.f32 %v879, 1.0
    %v1014 = vlog2.pop %v1013
    %v1015 = vmul.f32 %v1014, 0.6931472
    %v1016 = vmul.f32 -0.5, %v879
    %v1017 = vadd.f32 %v1016, 1.0
    %v1018 = vmul.f32 %v1017, %v879
    %v1019 = vand.u32 2147483647, %v879
    %vm1020 = vcmp.lt.f32.partialorder %v1019, 0.0004427343
    %v1021 = vsel %vm1020, %v1018, %v1015
    %v1022 = vadd.f32 %v881, 1.0
    %v1023 = vlog2.pop %v1022
    %v1024 = vmul.f32 %v1023, 0.6931472
    %v1025 = vmul.f32 -0.5, %v881
    %v1026 = vadd.f32 %v1025, 1.0
    %v1027 = vmul.f32 %v1026, %v881
    %v1028 = vand.u32 2147483647, %v881
    %vm1029 = vcmp.lt.f32.partialorder %v1028, 0.0004427343
    %v1030 = vsel %vm1029, %v1027, %v1024
    %v1031 = vadd.f32 %v883, 1.0
    %v1032 = vlog2.pop %v1031
    %v1033 = vmul.f32 %v1032, 0.6931472
    %v1034 = vmul.f32 -0.5, %v883
    %v1035 = vadd.f32 %v1034, 1.0
    %v1036 = vmul.f32 %v1035, %v883
    %v1037 = vand.u32 2147483647, %v883
    %vm1038 = vcmp.lt.f32.partialorder %v1037, 0.0004427343
    %v1039 = vsel %vm1038, %v1036, %v1033
    %v1040 = vadd.f32 %v885, 1.0
    %v1041 = vlog2.pop %v1040
    %v1042 = vmul.f32 %v1041, 0.6931472
    %v1043 = vmul.f32 -0.5, %v885
    %v1044 = vadd.f32 %v1043, 1.0
    %v1045 = vmul.f32 %v1044, %v885
    %v1046 = vand.u32 2147483647, %v885
    %vm1047 = vcmp.lt.f32.partialorder %v1046, 0.0004427343
    %v1048 = vsel %vm1047, %v1045, %v1042
    %v1049 = vadd.f32 %v887, 1.0
    %v1050 = vlog2.pop %v1049
    %v1051 = vmul.f32 %v1050, 0.6931472
    %v1052 = vmul.f32 -0.5, %v887
    %v1053 = vadd.f32 %v1052, 1.0
    %v1054 = vmul.f32 %v1053, %v887
    %v1055 = vand.u32 2147483647, %v887
    %vm1056 = vcmp.lt.f32.partialorder %v1055, 0.0004427343
    %v1057 = vsel %vm1056, %v1054, %v1051
    %v1058 = vadd.f32 %v889, 1.0
    %v1059 = vlog2.pop %v1058
    %v1060 = vmul.f32 %v1059, 0.6931472
    %v1061 = vmul.f32 -0.5, %v889
    %v1062 = vadd.f32 %v1061, 1.0
    %v1063 = vmul.f32 %v1062, %v889
    %v1064 = vand.u32 2147483647, %v889
    %vm1065 = vcmp.lt.f32.partialorder %v1064, 0.0004427343
    %v1066 = vsel %vm1065, %v1063, %v1060
    %v1067 = vadd.f32 %v891, 1.0
    %v1068 = vlog2.pop %v1067
    %v1069 = vmul.f32 %v1068, 0.6931472
    %v1070 = vmul.f32 -0.5, %v891
    %v1071 = vadd.f32 %v1070, 1.0
    %v1072 = vmul.f32 %v1071, %v891
    %v1073 = vand.u32 2147483647, %v891
    %vm1074 = vcmp.lt.f32.partialorder %v1073, 0.0004427343
    %v1075 = vsel %vm1074, %v1072, %v1069
    %v1076 = vadd.f32 %v893, 1.0
    %v1077 = vlog2.pop %v1076
    %v1078 = vmul.f32 %v1077, 0.6931472
    %v1079 = vmul.f32 -0.5, %v893
    %v1080 = vadd.f32 %v1079, 1.0
    %v1081 = vmul.f32 %v1080, %v893
    %v1082 = vand.u32 2147483647, %v893
    %vm1083 = vcmp.lt.f32.partialorder %v1082, 0.0004427343
    %v1084 = vsel %vm1083, %v1081, %v1078
    %v1085 = vadd.f32 %v895, 1.0
    %v1086 = vlog2.pop %v1085
    %v1087 = vmul.f32 %v1086, 0.6931472
    %v1088 = vmul.f32 -0.5, %v895
    %v1089 = vadd.f32 %v1088, 1.0
    %v1090 = vmul.f32 %v1089, %v895
    %v1091 = vand.u32 2147483647, %v895
    %vm1092 = vcmp.lt.f32.partialorder %v1091, 0.0004427343
    %v1093 = vsel %vm1092, %v1090, %v1087
    %v1094 = vadd.f32 %v897, 1.0
    %v1095 = vlog2.pop %v1094
    %v1096 = vmul.f32 %v1095, 0.6931472
    %v1097 = vmul.f32 -0.5, %v897
    %v1098 = vadd.f32 %v1097, 1.0
    %v1099 = vmul.f32 %v1098, %v897
    %v1100 = vand.u32 2147483647, %v897
    %vm1101 = vcmp.lt.f32.partialorder %v1100, 0.0004427343
    %v1102 = vsel %vm1101, %v1099, %v1096
    %v1103 = vadd.f32 %v899, 1.0
    %v1104 = vlog2.pop %v1103
    %v1105 = vmul.f32 %v1104, 0.6931472
    %v1106 = vmul.f32 -0.5, %v899
    %v1107 = vadd.f32 %v1106, 1.0
    %v1108 = vmul.f32 %v1107, %v899
    %v1109 = vand.u32 2147483647, %v899
    %vm1110 = vcmp.lt.f32.partialorder %v1109, 0.0004427343
    %v1111 = vsel %vm1110, %v1108, %v1105
    %v1112 = vadd.f32 %v901, 1.0
    %v1113 = vlog2.pop %v1112
    %v1114 = vmul.f32 %v1113, 0.6931472
    %v1115 = vmul.f32 -0.5, %v901
    %v1116 = vadd.f32 %v1115, 1.0
    %v1117 = vmul.f32 %v1116, %v901
    %v1118 = vand.u32 2147483647, %v901
    %vm1119 = vcmp.lt.f32.partialorder %v1118, 0.0004427343
    %v1120 = vsel %vm1119, %v1117, %v1114
    %v1121 = vadd.f32 %v903, 1.0
    %v1122 = vlog2.pop %v1121
    %v1123 = vmul.f32 %v1122, 0.6931472
    %v1124 = vmul.f32 -0.5, %v903
    %v1125 = vadd.f32 %v1124, 1.0
    %v1126 = vmul.f32 %v1125, %v903
    %v1127 = vand.u32 2147483647, %v903
    %vm1128 = vcmp.lt.f32.partialorder %v1127, 0.0004427343
    %v1129 = vsel %vm1128, %v1126, %v1123
    %v1130 = vadd.f32 %v905, 1.0
    %v1131 = vlog2.pop %v1130
    %v1132 = vmul.f32 %v1131, 0.6931472
    %v1133 = vmul.f32 -0.5, %v905
    %v1134 = vadd.f32 %v1133, 1.0
    %v1135 = vmul.f32 %v1134, %v905
    %v1136 = vand.u32 2147483647, %v905
    %vm1137 = vcmp.lt.f32.partialorder %v1136, 0.0004427343
    %v1138 = vsel %vm1137, %v1135, %v1132
    %v1139 = vadd.f32 %v907, 1.0
    %v1140 = vlog2.pop %v1139
    %v1141 = vmul.f32 %v1140, 0.6931472
    %v1142 = vmul.f32 -0.5, %v907
    %v1143 = vadd.f32 %v1142, 1.0
    %v1144 = vmul.f32 %v1143, %v907
    %v1145 = vand.u32 2147483647, %v907
    %vm1146 = vcmp.lt.f32.partialorder %v1145, 0.0004427343
    %v1147 = vsel %vm1146, %v1144, %v1141
    %v1148 = vadd.f32 %v909, 1.0
    %v1149 = vlog2.pop %v1148
    %v1150 = vmul.f32 %v1149, 0.6931472
    %v1151 = vmul.f32 -0.5, %v909
    %v1152 = vadd.f32 %v1151, 1.0
    %v1153 = vmul.f32 %v1152, %v909
    %v1154 = vand.u32 2147483647, %v909
    %vm1155 = vcmp.lt.f32.partialorder %v1154, 0.0004427343
    %v1156 = vsel %vm1155, %v1153, %v1150
    %v1157 = vadd.f32 %v911, 1.0
    %v1158 = vlog2.pop %v1157
    %v1159 = vmul.f32 %v1158, 0.6931472
    %v1160 = vmul.f32 -0.5, %v911
    %v1161 = vadd.f32 %v1160, 1.0
    %v1162 = vmul.f32 %v1161, %v911
    %v1163 = vand.u32 2147483647, %v911
    %vm1164 = vcmp.lt.f32.partialorder %v1163, 0.0004427343
    %v1165 = vsel %vm1164, %v1162, %v1159
    %v1166 = vadd.f32 %v913, 1.0
    %v1167 = vlog2.pop %v1166
    %v1168 = vmul.f32 %v1167, 0.6931472
    %v1169 = vmul.f32 -0.5, %v913
    %v1170 = vadd.f32 %v1169, 1.0
    %v1171 = vmul.f32 %v1170, %v913
    %v1172 = vand.u32 2147483647, %v913
    %vm1173 = vcmp.lt.f32.partialorder %v1172, 0.0004427343
    %v1174 = vsel %vm1173, %v1171, %v1168
    %v1175 = vadd.f32 %v915, 1.0
    %v1176 = vlog2.pop %v1175
    %v1177 = vmul.f32 %v1176, 0.6931472
    %v1178 = vmul.f32 -0.5, %v915
    %v1179 = vadd.f32 %v1178, 1.0
    %v1180 = vmul.f32 %v1179, %v915
    %v1181 = vand.u32 2147483647, %v915
    %vm1182 = vcmp.lt.f32.partialorder %v1181, 0.0004427343
    %v1183 = vsel %vm1182, %v1180, %v1177
    %v1184 = vadd.f32 %v917, 1.0
    %v1185 = vlog2.pop %v1184
    %v1186 = vmul.f32 %v1185, 0.6931472
    %v1187 = vmul.f32 -0.5, %v917
    %v1188 = vadd.f32 %v1187, 1.0
    %v1189 = vmul.f32 %v1188, %v917
    %v1190 = vand.u32 2147483647, %v917
    %vm1191 = vcmp.lt.f32.partialorder %v1190, 0.0004427343
    %v1192 = vsel %vm1191, %v1189, %v1186
    %v1193 = vadd.f32 %v919, 1.0
    %v1194 = vlog2.pop %v1193
    %v1195 = vmul.f32 %v1194, 0.6931472
    %v1196 = vmul.f32 -0.5, %v919
    %v1197 = vadd.f32 %v1196, 1.0
    %v1198 = vmul.f32 %v1197, %v919
    %v1199 = vand.u32 2147483647, %v919
    %vm1200 = vcmp.lt.f32.partialorder %v1199, 0.0004427343
    %v1201 = vsel %vm1200, %v1198, %v1195
    %v1202 = vadd.f32 %v921, 1.0
    %v1203 = vlog2.pop %v1202
    %v1204 = vmul.f32 %v1203, 0.6931472
    %v1205 = vmul.f32 -0.5, %v921
    %v1206 = vadd.f32 %v1205, 1.0
    %v1207 = vmul.f32 %v1206, %v921
    %v1208 = vand.u32 2147483647, %v921
    %vm1209 = vcmp.lt.f32.partialorder %v1208, 0.0004427343
    %v1210 = vsel %vm1209, %v1207, %v1204
    %v1211 = vadd.f32 %v923, 1.0
    %v1212 = vlog2.pop %v1211
    %v1213 = vmul.f32 %v1212, 0.6931472
    %v1214 = vmul.f32 -0.5, %v923
    %v1215 = vadd.f32 %v1214, 1.0
    %v1216 = vmul.f32 %v1215, %v923
    %v1217 = vand.u32 2147483647, %v923
    %vm1218 = vcmp.lt.f32.partialorder %v1217, 0.0004427343
    %v1219 = vsel %vm1218, %v1216, %v1213
    %v1220 = vadd.f32 %v925, 1.0
    %v1221 = vlog2.pop %v1220
    %v1222 = vmul.f32 %v1221, 0.6931472
    %v1223 = vmul.f32 -0.5, %v925
    %v1224 = vadd.f32 %v1223, 1.0
    %v1225 = vmul.f32 %v1224, %v925
    %v1226 = vand.u32 2147483647, %v925
    %vm1227 = vcmp.lt.f32.partialorder %v1226, 0.0004427343
    %v1228 = vsel %vm1227, %v1225, %v1222
    %v1229 = vadd.f32 %v927, 1.0
    %v1230 = vlog2.pop %v1229
    %v1231 = vmul.f32 %v1230, 0.6931472
    %v1232 = vmul.f32 -0.5, %v927
    %v1233 = vadd.f32 %v1232, 1.0
    %v1234 = vmul.f32 %v1233, %v927
    %v1235 = vand.u32 2147483647, %v927
    %vm1236 = vcmp.lt.f32.partialorder %v1235, 0.0004427343
    %v1237 = vsel %vm1236, %v1234, %v1231
    %v1238 = vadd.f32 %v929, 1.0
    %v1239 = vlog2.pop %v1238
    %v1240 = vmul.f32 %v1239, 0.6931472
    %v1241 = vmul.f32 -0.5, %v929
    %v1242 = vadd.f32 %v1241, 1.0
    %v1243 = vmul.f32 %v1242, %v929
    %v1244 = vand.u32 2147483647, %v929
    %vm1245 = vcmp.lt.f32.partialorder %v1244, 0.0004427343
    %v1246 = vsel %vm1245, %v1243, %v1240
    %v1247 = vadd.f32 %v931, 1.0
    %v1248 = vlog2.pop %v1247
    %v1249 = vmul.f32 %v1248, 0.6931472
    %v1250 = vmul.f32 -0.5, %v931
    %v1251 = vadd.f32 %v1250, 1.0
    %v1252 = vmul.f32 %v1251, %v931
    %v1253 = vand.u32 2147483647, %v931
    %vm1254 = vcmp.lt.f32.partialorder %v1253, 0.0004427343
    %v1255 = vsel %vm1254, %v1252, %v1249
    %v1256 = vadd.f32 %v933, 1.0
    %v1257 = vlog2.pop %v1256
    %v1258 = vmul.f32 %v1257, 0.6931472
    %v1259 = vmul.f32 -0.5, %v933
    %v1260 = vadd.f32 %v1259, 1.0
    %v1261 = vmul.f32 %v1260, %v933
    %v1262 = vand.u32 2147483647, %v933
    %vm1263 = vcmp.lt.f32.partialorder %v1262, 0.0004427343
    %v1264 = vsel %vm1263, %v1261, %v1258
    %v1265 = vadd.f32 %v935, 1.0
    %v1266 = vlog2.pop %v1265
    %v1267 = vmul.f32 %v1266, 0.6931472
    %v1268 = vmul.f32 -0.5, %v935
    %v1269 = vadd.f32 %v1268, 1.0
    %v1270 = vmul.f32 %v1269, %v935
    %v1271 = vand.u32 2147483647, %v935
    %vm1272 = vcmp.lt.f32.partialorder %v1271, 0.0004427343
    %v1273 = vsel %vm1272, %v1270, %v1267
    %v1274 = vadd.f32 %v937, 1.0
    %v1275 = vlog2.pop %v1274
    %v1276 = vmul.f32 %v1275, 0.6931472
    %v1277 = vmul.f32 -0.5, %v937
    %v1278 = vadd.f32 %v1277, 1.0
    %v1279 = vmul.f32 %v1278, %v937
    %v1280 = vand.u32 2147483647, %v937
    %vm1281 = vcmp.lt.f32.partialorder %v1280, 0.0004427343
    %v1282 = vsel %vm1281, %v1279, %v1276
    %v1283 = vadd.f32 %v939, 1.0
    %v1284 = vlog2.pop %v1283
    %v1285 = vmul.f32 %v1284, 0.6931472
    %v1286 = vmul.f32 -0.5, %v939
    %v1287 = vadd.f32 %v1286, 1.0
    %v1288 = vmul.f32 %v1287, %v939
    %v1289 = vand.u32 2147483647, %v939
    %vm1290 = vcmp.lt.f32.partialorder %v1289, 0.0004427343
    %v1291 = vsel %vm1290, %v1288, %v1285
    %v1292 = vadd.f32 %v941, 1.0
    %v1293 = vlog2.pop %v1292
    %v1294 = vmul.f32 %v1293, 0.6931472
    %v1295 = vmul.f32 -0.5, %v941
    %v1296 = vadd.f32 %v1295, 1.0
    %v1297 = vmul.f32 %v1296, %v941
    %v1298 = vand.u32 2147483647, %v941
    %vm1299 = vcmp.lt.f32.partialorder %v1298, 0.0004427343
    %v1300 = vsel %vm1299, %v1297, %v1294
    %v1301 = vadd.f32 %v943, 1.0
    %v1302 = vlog2.pop %v1301
    %v1303 = vmul.f32 %v1302, 0.6931472
    %v1304 = vmul.f32 -0.5, %v943
    %v1305 = vadd.f32 %v1304, 1.0
    %v1306 = vmul.f32 %v1305, %v943
    %v1307 = vand.u32 2147483647, %v943
    %vm1308 = vcmp.lt.f32.partialorder %v1307, 0.0004427343
    %v1309 = vsel %vm1308, %v1306, %v1303
    %v1310 = vadd.f32 %v945, 1.0
    %v1311 = vlog2.pop %v1310
    %v1312 = vmul.f32 %v1311, 0.6931472
    %v1313 = vmul.f32 -0.5, %v945
    %v1314 = vadd.f32 %v1313, 1.0
    %v1315 = vmul.f32 %v1314, %v945
    %v1316 = vand.u32 2147483647, %v945
    %vm1317 = vcmp.lt.f32.partialorder %v1316, 0.0004427343
    %v1318 = vsel %vm1317, %v1315, %v1312
    %v1319 = vadd.f32 %v947, 1.0
    %v1320 = vlog2.pop %v1319
    %v1321 = vmul.f32 %v1320, 0.6931472
    %v1322 = vmul.f32 -0.5, %v947
    %v1323 = vadd.f32 %v1322, 1.0
    %v1324 = vmul.f32 %v1323, %v947
    %v1325 = vand.u32 2147483647, %v947
    %vm1326 = vcmp.lt.f32.partialorder %v1325, 0.0004427343
    %v1327 = vsel %vm1326, %v1324, %v1321
    %v1328 = vadd.f32 %v949, 1.0
    %v1329 = vlog2.pop %v1328
    %v1330 = vmul.f32 %v1329, 0.6931472
    %v1331 = vmul.f32 -0.5, %v949
    %v1332 = vadd.f32 %v1331, 1.0
    %v1333 = vmul.f32 %v1332, %v949
    %v1334 = vand.u32 2147483647, %v949
    %vm1335 = vcmp.lt.f32.partialorder %v1334, 0.0004427343
    %v1336 = vsel %vm1335, %v1333, %v1330
    %v1337 = vadd.f32 %v951, 1.0
    %v1338 = vlog2.pop %v1337
    %v1339 = vmul.f32 %v1338, 0.6931472
    %v1340 = vmul.f32 -0.5, %v951
    %v1341 = vadd.f32 %v1340, 1.0
    %v1342 = vmul.f32 %v1341, %v951
    %v1343 = vand.u32 2147483647, %v951
    %vm1344 = vcmp.lt.f32.partialorder %v1343, 0.0004427343
    %v1345 = vsel %vm1344, %v1342, %v1339
    %v1346 = vadd.f32 %v953, 1.0
    %v1347 = vlog2.pop %v1346
    %v1348 = vmul.f32 %v1347, 0.6931472
    %v1349 = vmul.f32 -0.5, %v953
    %v1350 = vadd.f32 %v1349, 1.0
    %v1351 = vmul.f32 %v1350, %v953
    %v1352 = vand.u32 2147483647, %v953
    %vm1353 = vcmp.lt.f32.partialorder %v1352, 0.0004427343
    %v1354 = vsel %vm1353, %v1351, %v1348
    %v1355 = vadd.f32 %v955, 1.0
    %v1356 = vlog2.pop %v1355
    %v1357 = vmul.f32 %v1356, 0.6931472
    %v1358 = vmul.f32 -0.5, %v955
    %v1359 = vadd.f32 %v1358, 1.0
    %v1360 = vmul.f32 %v1359, %v955
    %v1361 = vand.u32 2147483647, %v955
    %vm1362 = vcmp.lt.f32.partialorder %v1361, 0.0004427343
    %v1363 = vsel %vm1362, %v1360, %v1357
    %v1364 = vadd.f32 %v957, 1.0
    %v1365 = vlog2.pop %v1364
    %v1366 = vmul.f32 %v1365, 0.6931472
    %v1367 = vmul.f32 -0.5, %v957
    %v1368 = vadd.f32 %v1367, 1.0
    %v1369 = vmul.f32 %v1368, %v957
    %v1370 = vand.u32 2147483647, %v957
    %vm1371 = vcmp.lt.f32.partialorder %v1370, 0.0004427343
    %v1372 = vsel %vm1371, %v1369, %v1366
    %v1373 = vadd.f32 %v959, 1.0
    %v1374 = vlog2.pop %v1373
    %v1375 = vmul.f32 %v1374, 0.6931472
    %v1376 = vmul.f32 -0.5, %v959
    %v1377 = vadd.f32 %v1376, 1.0
    %v1378 = vmul.f32 %v1377, %v959
    %v1379 = vand.u32 2147483647, %v959
    %vm1380 = vcmp.lt.f32.partialorder %v1379, 0.0004427343
    %v1381 = vsel %vm1380, %v1378, %v1375
    %v1382 = vadd.f32 %v961, 1.0
    %v1383 = vlog2.pop %v1382
    %v1384 = vmul.f32 %v1383, 0.6931472
    %v1385 = vmul.f32 -0.5, %v961
    %v1386 = vadd.f32 %v1385, 1.0
    %v1387 = vmul.f32 %v1386, %v961
    %v1388 = vand.u32 2147483647, %v961
    %vm1389 = vcmp.lt.f32.partialorder %v1388, 0.0004427343
    %v1390 = vsel %vm1389, %v1387, %v1384
    %v1391 = vadd.f32 %v963, 1.0
    %v1392 = vlog2.pop %v1391
    %v1393 = vmul.f32 %v1392, 0.6931472
    %v1394 = vmul.f32 -0.5, %v963
    %v1395 = vadd.f32 %v1394, 1.0
    %v1396 = vmul.f32 %v1395, %v963
    %v1397 = vand.u32 2147483647, %v963
    %vm1398 = vcmp.lt.f32.partialorder %v1397, 0.0004427343
    %v1399 = vsel %vm1398, %v1396, %v1393
    %v1400 = vadd.f32 %v965, 1.0
    %v1401 = vlog2.pop %v1400
    %v1402 = vmul.f32 %v1401, 0.6931472
    %v1403 = vmul.f32 -0.5, %v965
    %v1404 = vadd.f32 %v1403, 1.0
    %v1405 = vmul.f32 %v1404, %v965
    %v1406 = vand.u32 2147483647, %v965
    %vm1407 = vcmp.lt.f32.partialorder %v1406, 0.0004427343
    %v1408 = vsel %vm1407, %v1405, %v1402
    %v1409 = vadd.f32 %v967, 1.0
    %v1410 = vlog2.pop %v1409
    %v1411 = vmul.f32 %v1410, 0.6931472
    %v1412 = vmul.f32 -0.5, %v967
    %v1413 = vadd.f32 %v1412, 1.0
    %v1414 = vmul.f32 %v1413, %v967
    %v1415 = vand.u32 2147483647, %v967
    %vm1416 = vcmp.lt.f32.partialorder %v1415, 0.0004427343
    %v1417 = vsel %vm1416, %v1414, %v1411
    %v1418 = vadd.f32 %v969, 1.0
    %v1419 = vlog2.pop %v1418
    %v1420 = vmul.f32 %v1419, 0.6931472
    %v1421 = vmul.f32 -0.5, %v969
    %v1422 = vadd.f32 %v1421, 1.0
    %v1423 = vmul.f32 %v1422, %v969
    %v1424 = vand.u32 2147483647, %v969
    %vm1425 = vcmp.lt.f32.partialorder %v1424, 0.0004427343
    %v1426 = vsel %vm1425, %v1423, %v1420
    %v1427 = vadd.f32 %v971, 1.0
    %v1428 = vlog2.pop %v1427
    %v1429 = vmul.f32 %v1428, 0.6931472
    %v1430 = vmul.f32 -0.5, %v971
    %v1431 = vadd.f32 %v1430, 1.0
    %v1432 = vmul.f32 %v1431, %v971
    %v1433 = vand.u32 2147483647, %v971
    %vm1434 = vcmp.lt.f32.partialorder %v1433, 0.0004427343
    %v1435 = vsel %vm1434, %v1432, %v1429
    %v1436 = vadd.f32 %v973, 1.0
    %v1437 = vlog2.pop %v1436
    %v1438 = vmul.f32 %v1437, 0.6931472
    %v1439 = vmul.f32 -0.5, %v973
    %v1440 = vadd.f32 %v1439, 1.0
    %v1441 = vmul.f32 %v1440, %v973
    %v1442 = vand.u32 2147483647, %v973
    %vm1443 = vcmp.lt.f32.partialorder %v1442, 0.0004427343
    %v1444 = vsel %vm1443, %v1441, %v1438
    %v1445 = vadd.f32 %v975, 1.0
    %v1446 = vlog2.pop %v1445
    %v1447 = vmul.f32 %v1446, 0.6931472
    %v1448 = vmul.f32 -0.5, %v975
    %v1449 = vadd.f32 %v1448, 1.0
    %v1450 = vmul.f32 %v1449, %v975
    %v1451 = vand.u32 2147483647, %v975
    %vm1452 = vcmp.lt.f32.partialorder %v1451, 0.0004427343
    %v1453 = vsel %vm1452, %v1450, %v1447
    %v1454 = vadd.f32 %v977, 1.0
    %v1455 = vlog2.pop %v1454
    %v1456 = vmul.f32 %v1455, 0.6931472
    %v1457 = vmul.f32 -0.5, %v977
    %v1458 = vadd.f32 %v1457, 1.0
    %v1459 = vmul.f32 %v1458, %v977
    %v1460 = vand.u32 2147483647, %v977
    %vm1461 = vcmp.lt.f32.partialorder %v1460, 0.0004427343
    %v1462 = vsel %vm1461, %v1459, %v1456
    %v1463 = vadd.f32 %v979, 1.0
    %v1464 = vlog2.pop %v1463
    %v1465 = vmul.f32 %v1464, 0.6931472
    %v1466 = vmul.f32 -0.5, %v979
    %v1467 = vadd.f32 %v1466, 1.0
    %v1468 = vmul.f32 %v1467, %v979
    %v1469 = vand.u32 2147483647, %v979
    %vm1470 = vcmp.lt.f32.partialorder %v1469, 0.0004427343
    %v1471 = vsel %vm1470, %v1468, %v1465
    %v1472 = vadd.f32 %v981, 1.0
    %v1473 = vlog2.pop %v1472
    %v1474 = vmul.f32 %v1473, 0.6931472
    %v1475 = vmul.f32 -0.5, %v981
    %v1476 = vadd.f32 %v1475, 1.0
    %v1477 = vmul.f32 %v1476, %v981
    %v1478 = vand.u32 2147483647, %v981
    %vm1479 = vcmp.lt.f32.partialorder %v1478, 0.0004427343
    %v1480 = vsel %vm1479, %v1477, %v1474
    %v1481 = vadd.f32 %v983, 1.0
    %v1482 = vlog2.pop %v1481
    %v1483 = vmul.f32 %v1482, 0.6931472
    %v1484 = vmul.f32 -0.5, %v983
    %v1485 = vadd.f32 %v1484, 1.0
    %v1486 = vmul.f32 %v1485, %v983
    %v1487 = vand.u32 2147483647, %v983
    %vm1488 = vcmp.lt.f32.partialorder %v1487, 0.0004427343
    %v1489 = vsel %vm1488, %v1486, %v1483
    %v1490 = vadd.f32 %v985, 1.0
    %v1491 = vlog2.pop %v1490
    %v1492 = vmul.f32 %v1491, 0.6931472
    %v1493 = vmul.f32 -0.5, %v985
    %v1494 = vadd.f32 %v1493, 1.0
    %v1495 = vmul.f32 %v1494, %v985
    %v1496 = vand.u32 2147483647, %v985
    %vm1497 = vcmp.lt.f32.partialorder %v1496, 0.0004427343
    %v1498 = vsel %vm1497, %v1495, %v1492
    %v1499 = vadd.f32 %v987, 1.0
    %v1500 = vlog2.pop %v1499
    %v1501 = vmul.f32 %v1500, 0.6931472
    %v1502 = vmul.f32 -0.5, %v987
    %v1503 = vadd.f32 %v1502, 1.0
    %v1504 = vmul.f32 %v1503, %v987
    %v1505 = vand.u32 2147483647, %v987
    %vm1506 = vcmp.lt.f32.partialorder %v1505, 0.0004427343
    %v1507 = vsel %vm1506, %v1504, %v1501
    %v1508 = vadd.f32 %v989, 1.0
    %v1509 = vlog2.pop %v1508
    %v1510 = vmul.f32 %v1509, 0.6931472
    %v1511 = vmul.f32 -0.5, %v989
    %v1512 = vadd.f32 %v1511, 1.0
    %v1513 = vmul.f32 %v1512, %v989
    %v1514 = vand.u32 2147483647, %v989
    %vm1515 = vcmp.lt.f32.partialorder %v1514, 0.0004427343
    %v1516 = vsel %vm1515, %v1513, %v1510
    %v1517 = vadd.f32 %v991, 1.0
    %v1518 = vlog2.pop %v1517
    %v1519 = vmul.f32 %v1518, 0.6931472
    %v1520 = vmul.f32 -0.5, %v991
    %v1521 = vadd.f32 %v1520, 1.0
    %v1522 = vmul.f32 %v1521, %v991
    %v1523 = vand.u32 2147483647, %v991
    %vm1524 = vcmp.lt.f32.partialorder %v1523, 0.0004427343
    %v1525 = vsel %vm1524, %v1522, %v1519
    %v1526 = vadd.f32 %v993, 1.0
    %v1527 = vlog2.pop %v1526
    %v1528 = vmul.f32 %v1527, 0.6931472
    %v1529 = vmul.f32 -0.5, %v993
    %v1530 = vadd.f32 %v1529, 1.0
    %v1531 = vmul.f32 %v1530, %v993
    %v1532 = vand.u32 2147483647, %v993
    %vm1533 = vcmp.lt.f32.partialorder %v1532, 0.0004427343
    %v1534 = vsel %vm1533, %v1531, %v1528
    %v1535 = vadd.f32 %v995, 1.0
    %v1536 = vlog2.pop %v1535
    %v1537 = vmul.f32 %v1536, 0.6931472
    %v1538 = vmul.f32 -0.5, %v995
    %v1539 = vadd.f32 %v1538, 1.0
    %v1540 = vmul.f32 %v1539, %v995
    %v1541 = vand.u32 2147483647, %v995
    %vm1542 = vcmp.lt.f32.partialorder %v1541, 0.0004427343
    %v1543 = vsel %vm1542, %v1540, %v1537
    %v1544 = vadd.f32 %v997, 1.0
    %v1545 = vlog2.pop %v1544
    %v1546 = vmul.f32 %v1545, 0.6931472
    %v1547 = vmul.f32 -0.5, %v997
    %v1548 = vadd.f32 %v1547, 1.0
    %v1549 = vmul.f32 %v1548, %v997
    %v1550 = vand.u32 2147483647, %v997
    %vm1551 = vcmp.lt.f32.partialorder %v1550, 0.0004427343
    %v1552 = vsel %vm1551, %v1549, %v1546
    %v1553 = vadd.f32 %v999, 1.0
    %v1554 = vlog2.pop %v1553
    %v1555 = vmul.f32 %v1554, 0.6931472
    %v1556 = vmul.f32 -0.5, %v999
    %v1557 = vadd.f32 %v1556, 1.0
    %v1558 = vmul.f32 %v1557, %v999
    %v1559 = vand.u32 2147483647, %v999
    %vm1560 = vcmp.lt.f32.partialorder %v1559, 0.0004427343
    %v1561 = vsel %vm1560, %v1558, %v1555
    %v1562 = vadd.f32 %v1001, 1.0
    %v1563 = vlog2.pop %v1562
    %v1564 = vmul.f32 %v1563, 0.6931472
    %v1565 = vmul.f32 -0.5, %v1001
    %v1566 = vadd.f32 %v1565, 1.0
    %v1567 = vmul.f32 %v1566, %v1001
    %v1568 = vand.u32 2147483647, %v1001
    %vm1569 = vcmp.lt.f32.partialorder %v1568, 0.0004427343
    %v1570 = vsel %vm1569, %v1567, %v1564
    %v1571 = vadd.f32 %v1003, 1.0
    %v1572 = vlog2.pop %v1571
    %v1573 = vmul.f32 %v1572, 0.6931472
    %v1574 = vmul.f32 -0.5, %v1003
    %v1575 = vadd.f32 %v1574, 1.0
    %v1576 = vmul.f32 %v1575, %v1003
    %v1577 = vand.u32 2147483647, %v1003
    %vm1578 = vcmp.lt.f32.partialorder %v1577, 0.0004427343
    %v1579 = vsel %vm1578, %v1576, %v1573
    %v1580 = vadd.f32 %v684, %v1012
    %v1581 = vadd.f32 %v685, %v1021
    %v1582 = vadd.f32 %v686, %v1030
    %v1583 = vadd.f32 %v687, %v1039
    %v1584 = vadd.f32 %v688, %v1048
    %v1585 = vadd.f32 %v689, %v1057
    %v1586 = vadd.f32 %v690, %v1066
    %v1587 = vadd.f32 %v691, %v1075
    %v1588 = vadd.f32 %v692, %v1084
    %v1589 = vadd.f32 %v693, %v1093
    %v1590 = vadd.f32 %v694, %v1102
    %v1591 = vadd.f32 %v695, %v1111
    %v1592 = vadd.f32 %v696, %v1120
    %v1593 = vadd.f32 %v697, %v1129
    %v1594 = vadd.f32 %v698, %v1138
    %v1595 = vadd.f32 %v699, %v1147
    %v1596 = vadd.f32 %v700, %v1156
    %v1597 = vadd.f32 %v701, %v1165
    %v1598 = vadd.f32 %v702, %v1174
    %v1599 = vadd.f32 %v703, %v1183
    %v1600 = vadd.f32 %v704, %v1192
    %v1601 = vadd.f32 %v705, %v1201
    %v1602 = vadd.f32 %v706, %v1210
    %v1603 = vadd.f32 %v707, %v1219
    %v1604 = vadd.f32 %v708, %v1228
    %v1605 = vadd.f32 %v709, %v1237
    %v1606 = vadd.f32 %v710, %v1246
    %v1607 = vadd.f32 %v711, %v1255
    %v1608 = vadd.f32 %v712, %v1264
    %v1609 = vadd.f32 %v713, %v1273
    %v1610 = vadd.f32 %v714, %v1282
    %v1611 = vadd.f32 %v715, %v1291
    %v1612 = vadd.f32 %v716, %v1300
    %v1613 = vadd.f32 %v717, %v1309
    %v1614 = vadd.f32 %v718, %v1318
    %v1615 = vadd.f32 %v719, %v1327
    %v1616 = vadd.f32 %v720, %v1336
    %v1617 = vadd.f32 %v721, %v1345
    %v1618 = vadd.f32 %v722, %v1354
    %v1619 = vadd.f32 %v723, %v1363
    %v1620 = vadd.f32 %v724, %v1372
    %v1621 = vadd.f32 %v725, %v1381
    %v1622 = vadd.f32 %v726, %v1390
    %v1623 = vadd.f32 %v727, %v1399
    %v1624 = vadd.f32 %v728, %v1408
    %v1625 = vadd.f32 %v729, %v1417
    %v1626 = vadd.f32 %v730, %v1426
    %v1627 = vadd.f32 %v731, %v1435
    %v1628 = vadd.f32 %v732, %v1444
    %v1629 = vadd.f32 %v733, %v1453
    %v1630 = vadd.f32 %v734, %v1462
    %v1631 = vadd.f32 %v735, %v1471
    %v1632 = vadd.f32 %v736, %v1480
    %v1633 = vadd.f32 %v737, %v1489
    %v1634 = vadd.f32 %v738, %v1498
    %v1635 = vadd.f32 %v739, %v1507
    %v1636 = vadd.f32 %v740, %v1516
    %v1637 = vadd.f32 %v741, %v1525
    %v1638 = vadd.f32 %v742, %v1534
    %v1639 = vadd.f32 %v743, %v1543
    %v1640 = vadd.f32 %v744, %v1552
    %v1641 = vadd.f32 %v745, %v1561
    %v1642 = vadd.f32 %v746, %v1570
    %v1643 = vadd.f32 %v747, %v1579
    %v1644 = vsub.f32 %v1580, 0.6931472
    %v1645 = vsub.f32 %v1581, 0.6931472
    %v1646 = vsub.f32 %v1582, 0.6931472
    %v1647 = vsub.f32 %v1583, 0.6931472
    %v1648 = vsub.f32 %v1584, 0.6931472
    %v1649 = vsub.f32 %v1585, 0.6931472
    %v1650 = vsub.f32 %v1586, 0.6931472
    %v1651 = vsub.f32 %v1587, 0.6931472
    %v1652 = vsub.f32 %v1588, 0.6931472
    %v1653 = vsub.f32 %v1589, 0.6931472
    %v1654 = vsub.f32 %v1590, 0.6931472
    %v1655 = vsub.f32 %v1591, 0.6931472
    %v1656 = vsub.f32 %v1592, 0.6931472
    %v1657 = vsub.f32 %v1593, 0.6931472
    %v1658 = vsub.f32 %v1594, 0.6931472
    %v1659 = vsub.f32 %v1595, 0.6931472
    %v1660 = vsub.f32 %v1596, 0.6931472
    %v1661 = vsub.f32 %v1597, 0.6931472
    %v1662 = vsub.f32 %v1598, 0.6931472
    %v1663 = vsub.f32 %v1599, 0.6931472
    %v1664 = vsub.f32 %v1600, 0.6931472
    %v1665 = vsub.f32 %v1601, 0.6931472
    %v1666 = vsub.f32 %v1602, 0.6931472
    %v1667 = vsub.f32 %v1603, 0.6931472
    %v1668 = vsub.f32 %v1604, 0.6931472
    %v1669 = vsub.f32 %v1605, 0.6931472
    %v1670 = vsub.f32 %v1606, 0.6931472
    %v1671 = vsub.f32 %v1607, 0.6931472
    %v1672 = vsub.f32 %v1608, 0.6931472
    %v1673 = vsub.f32 %v1609, 0.6931472
    %v1674 = vsub.f32 %v1610, 0.6931472
    %v1675 = vsub.f32 %v1611, 0.6931472
    %v1676 = vsub.f32 %v1612, 0.6931472
    %v1677 = vsub.f32 %v1613, 0.6931472
    %v1678 = vsub.f32 %v1614, 0.6931472
    %v1679 = vsub.f32 %v1615, 0.6931472
    %v1680 = vsub.f32 %v1616, 0.6931472
    %v1681 = vsub.f32 %v1617, 0.6931472
    %v1682 = vsub.f32 %v1618, 0.6931472
    %v1683 = vsub.f32 %v1619, 0.6931472
    %v1684 = vsub.f32 %v1620, 0.6931472
    %v1685 = vsub.f32 %v1621, 0.6931472
    %v1686 = vsub.f32 %v1622, 0.6931472
    %v1687 = vsub.f32 %v1623, 0.6931472
    %v1688 = vsub.f32 %v1624, 0.6931472
    %v1689 = vsub.f32 %v1625, 0.6931472
    %v1690 = vsub.f32 %v1626, 0.6931472
    %v1691 = vsub.f32 %v1627, 0.6931472
    %v1692 = vsub.f32 %v1628, 0.6931472
    %v1693 = vsub.f32 %v1629, 0.6931472
    %v1694 = vsub.f32 %v1630, 0.6931472
    %v1695 = vsub.f32 %v1631, 0.6931472
    %v1696 = vsub.f32 %v1632, 0.6931472
    %v1697 = vsub.f32 %v1633, 0.6931472
    %v1698 = vsub.f32 %v1634, 0.6931472
    %v1699 = vsub.f32 %v1635, 0.6931472
    %v1700 = vsub.f32 %v1636, 0.6931472
    %v1701 = vsub.f32 %v1637, 0.6931472
    %v1702 = vsub.f32 %v1638, 0.6931472
    %v1703 = vsub.f32 %v1639, 0.6931472
    %v1704 = vsub.f32 %v1640, 0.6931472
    %v1705 = vsub.f32 %v1641, 0.6931472
    %v1706 = vsub.f32 %v1642, 0.6931472
    %v1707 = vsub.f32 %v1643, 0.6931472
    %v1708 = vpack.c.bf16 %v1645, %v1644
    %v1709 = vpack.c.bf16 %v1647, %v1646
    %v1710 = vpack.c.bf16 %v1649, %v1648
    %v1711 = vpack.c.bf16 %v1651, %v1650
    %v1712 = vpack.c.bf16 %v1653, %v1652
    %v1713 = vpack.c.bf16 %v1655, %v1654
    %v1714 = vpack.c.bf16 %v1657, %v1656
    %v1715 = vpack.c.bf16 %v1659, %v1658
    %v1716 = vpack.c.bf16 %v1661, %v1660
    %v1717 = vpack.c.bf16 %v1663, %v1662
    %v1718 = vpack.c.bf16 %v1665, %v1664
    %v1719 = vpack.c.bf16 %v1667, %v1666
    %v1720 = vpack.c.bf16 %v1669, %v1668
    %v1721 = vpack.c.bf16 %v1671, %v1670
    %v1722 = vpack.c.bf16 %v1673, %v1672
    %v1723 = vpack.c.bf16 %v1675, %v1674
    %v1724 = vpack.c.bf16 %v1677, %v1676
    %v1725 = vpack.c.bf16 %v1679, %v1678
    %v1726 = vpack.c.bf16 %v1681, %v1680
    %v1727 = vpack.c.bf16 %v1683, %v1682
    %v1728 = vpack.c.bf16 %v1685, %v1684
    %v1729 = vpack.c.bf16 %v1687, %v1686
    %v1730 = vpack.c.bf16 %v1689, %v1688
    %v1731 = vpack.c.bf16 %v1691, %v1690
    %v1732 = vpack.c.bf16 %v1693, %v1692
    %v1733 = vpack.c.bf16 %v1695, %v1694
    %v1734 = vpack.c.bf16 %v1697, %v1696
    %v1735 = vpack.c.bf16 %v1699, %v1698
    %v1736 = vpack.c.bf16 %v1701, %v1700
    %v1737 = vpack.c.bf16 %v1703, %v1702
    %v1738 = vpack.c.bf16 %v1705, %v1704
    %v1739 = vpack.c.bf16 %v1707, %v1706
    %v1740 = vld [vmem:[%s6] sm:$0xf]
    %v1741 = vld [vmem:[%s6 + $0x4] sm:$0xf]
    %v1744 = vunpack.c.l.b16 %v1740
    %v1745 = vunpack.c.l.b16 %v1741
    %v1746 = vpack.c.b16 %v1745, %v1744
    %vm1748 = vcmask 130048
    %v1750 = vsel %vm1748, %v1708, 0
    %v1753 = vsel %vm1748, %v1709, 0
    %v1756 = vsel %vm1748, %v1710, 0
    %v1759 = vsel %vm1748, %v1711, 0
    %v1762 = vsel %vm1748, %v1712, 0
    %v1765 = vsel %vm1748, %v1713, 0
    %v1768 = vsel %vm1748, %v1714, 0
    %v1771 = vsel %vm1748, %v1715, 0
    %v1774 = vsel %vm1748, %v1716, 0
    %v1777 = vsel %vm1748, %v1717, 0
    %v1780 = vsel %vm1748, %v1718, 0
    %v1783 = vsel %vm1748, %v1719, 0
    %v1786 = vsel %vm1748, %v1720, 0
    %v1789 = vsel %vm1748, %v1721, 0
    %v1792 = vsel %vm1748, %v1722, 0
    %v1795 = vsel %vm1748, %v1723, 0
    %v1798 = vsel %vm1748, %v1724, 0
    %v1801 = vsel %vm1748, %v1725, 0
    %v1804 = vsel %vm1748, %v1726, 0
    %v1807 = vsel %vm1748, %v1727, 0
    %v1810 = vsel %vm1748, %v1728, 0
    %v1813 = vsel %vm1748, %v1729, 0
    %v1816 = vsel %vm1748, %v1730, 0
    %v1819 = vsel %vm1748, %v1731, 0
    %v1822 = vsel %vm1748, %v1732, 0
    %v1825 = vsel %vm1748, %v1733, 0
    %v1828 = vsel %vm1748, %v1734, 0
    %v1831 = vsel %vm1748, %v1735, 0
    %v1834 = vsel %vm1748, %v1736, 0
    %v1837 = vsel %vm1748, %v1737, 0
    %v1840 = vsel %vm1748, %v1738, 0
    %v1843 = vsel %vm1748, %v1739, 0
    %1845 = vmatpush.bf16.msra.mxu0 0
    %1846 = vmatpush.bf16.msra.mxu0 0
    %1847 = vmatpush.bf16.msra.mxu0 0
    %1848 = vmatpush.bf16.msra.mxu0 0
    %1849 = vmatpush.bf16.msra.mxu0 0
    %1850 = vmatpush.bf16.msra.mxu0 0
    %1851 = vmatpush.bf16.msra.mxu0 0
    %1852 = vmatpush.bf16.msra.mxu0 %v1746
    %1853 = vmatmul.bf16.gmra.mxu0 %v1750
    %v1854 = vpop.f32.mrf.mxu0
    %v1855 = vadd.f32 0.0, %v1854
    %v1856 = vpop.f32.mrf.mxu0
    %v1857 = vadd.f32 0.0, %v1856
    %1858 = vmatmul.bf16.gmra.mxu0 %v1753
    %v1859 = vpop.f32.mrf.mxu0
    %v1860 = vadd.f32 0.0, %v1859
    %v1861 = vpop.f32.mrf.mxu0
    %v1862 = vadd.f32 0.0, %v1861
    %1863 = vmatmul.bf16.gmra.mxu0 %v1756
    %v1864 = vpop.f32.mrf.mxu0
    %v1865 = vadd.f32 0.0, %v1864
    %v1866 = vpop.f32.mrf.mxu0
    %v1867 = vadd.f32 0.0, %v1866
    %1868 = vmatmul.bf16.gmra.mxu0 %v1759
    %v1869 = vpop.f32.mrf.mxu0
    %v1870 = vadd.f32 0.0, %v1869
    %v1871 = vpop.f32.mrf.mxu0
    %v1872 = vadd.f32 0.0, %v1871
    %1873 = vmatmul.bf16.gmra.mxu0 %v1762
    %v1874 = vpop.f32.mrf.mxu0
    %v1875 = vadd.f32 0.0, %v1874
    %v1876 = vpop.f32.mrf.mxu0
    %v1877 = vadd.f32 0.0, %v1876
    %1878 = vmatmul.bf16.gmra.mxu0 %v1765
    %v1879 = vpop.f32.mrf.mxu0
    %v1880 = vadd.f32 0.0, %v1879
    %v1881 = vpop.f32.mrf.mxu0
    %v1882 = vadd.f32 0.0, %v1881
    %1883 = vmatmul.bf16.gmra.mxu0 %v1768
    %v1884 = vpop.f32.mrf.mxu0
    %v1885 = vadd.f32 0.0, %v1884
    %v1886 = vpop.f32.mrf.mxu0
    %v1887 = vadd.f32 0.0, %v1886
    %1888 = vmatmul.bf16.gmra.mxu0 %v1771
    %v1889 = vpop.f32.mrf.mxu0
    %v1890 = vadd.f32 0.0, %v1889
    %v1891 = vpop.f32.mrf.mxu0
    %v1892 = vadd.f32 0.0, %v1891
    %1893 = vmatmul.bf16.gmra.mxu0 %v1774
    %v1894 = vpop.f32.mrf.mxu0
    %v1895 = vadd.f32 0.0, %v1894
    %v1896 = vpop.f32.mrf.mxu0
    %v1897 = vadd.f32 0.0, %v1896
    %1898 = vmatmul.bf16.gmra.mxu0 %v1777
    %v1899 = vpop.f32.mrf.mxu0
    %v1900 = vadd.f32 0.0, %v1899
    %v1901 = vpop.f32.mrf.mxu0
    %v1902 = vadd.f32 0.0, %v1901
    %1903 = vmatmul.bf16.gmra.mxu0 %v1780
    %v1904 = vpop.f32.mrf.mxu0
    %v1905 = vadd.f32 0.0, %v1904
    %v1906 = vpop.f32.mrf.mxu0
    %v1907 = vadd.f32 0.0, %v1906
    %1908 = vmatmul.bf16.gmra.mxu0 %v1783
    %v1909 = vpop.f32.mrf.mxu0
    %v1910 = vadd.f32 0.0, %v1909
    %v1911 = vpop.f32.mrf.mxu0
    %v1912 = vadd.f32 0.0, %v1911
    %1913 = vmatmul.bf16.gmra.mxu0 %v1786
    %v1914 = vpop.f32.mrf.mxu0
    %v1915 = vadd.f32 0.0, %v1914
    %v1916 = vpop.f32.mrf.mxu0
    %v1917 = vadd.f32 0.0, %v1916
    %1918 = vmatmul.bf16.gmra.mxu0 %v1789
    %v1919 = vpop.f32.mrf.mxu0
    %v1920 = vadd.f32 0.0, %v1919
    %v1921 = vpop.f32.mrf.mxu0
    %v1922 = vadd.f32 0.0, %v1921
    %1923 = vmatmul.bf16.gmra.mxu0 %v1792
    %v1924 = vpop.f32.mrf.mxu0
    %v1925 = vadd.f32 0.0, %v1924
    %v1926 = vpop.f32.mrf.mxu0
    %v1927 = vadd.f32 0.0, %v1926
    %1928 = vmatmul.bf16.gmra.mxu0 %v1795
    %v1929 = vpop.f32.mrf.mxu0
    %v1930 = vadd.f32 0.0, %v1929
    %v1931 = vpop.f32.mrf.mxu0
    %v1932 = vadd.f32 0.0, %v1931
    %1933 = vmatmul.bf16.gmra.mxu0 %v1798
    %v1934 = vpop.f32.mrf.mxu0
    %v1935 = vadd.f32 0.0, %v1934
    %v1936 = vpop.f32.mrf.mxu0
    %v1937 = vadd.f32 0.0, %v1936
    %1938 = vmatmul.bf16.gmra.mxu0 %v1801
    %v1939 = vpop.f32.mrf.mxu0
    %v1940 = vadd.f32 0.0, %v1939
    %v1941 = vpop.f32.mrf.mxu0
    %v1942 = vadd.f32 0.0, %v1941
    %1943 = vmatmul.bf16.gmra.mxu0 %v1804
    %v1944 = vpop.f32.mrf.mxu0
    %v1945 = vadd.f32 0.0, %v1944
    %v1946 = vpop.f32.mrf.mxu0
    %v1947 = vadd.f32 0.0, %v1946
    %1948 = vmatmul.bf16.gmra.mxu0 %v1807
    %v1949 = vpop.f32.mrf.mxu0
    %v1950 = vadd.f32 0.0, %v1949
    %v1951 = vpop.f32.mrf.mxu0
    %v1952 = vadd.f32 0.0, %v1951
    %1953 = vmatmul.bf16.gmra.mxu0 %v1810
    %v1954 = vpop.f32.mrf.mxu0
    %v1955 = vadd.f32 0.0, %v1954
    %v1956 = vpop.f32.mrf.mxu0
    %v1957 = vadd.f32 0.0, %v1956
    %1958 = vmatmul.bf16.gmra.mxu0 %v1813
    %v1959 = vpop.f32.mrf.mxu0
    %v1960 = vadd.f32 0.0, %v1959
    %v1961 = vpop.f32.mrf.mxu0
    %v1962 = vadd.f32 0.0, %v1961
    %1963 = vmatmul.bf16.gmra.mxu0 %v1816
    %v1964 = vpop.f32.mrf.mxu0
    %v1965 = vadd.f32 0.0, %v1964
    %v1966 = vpop.f32.mrf.mxu0
    %v1967 = vadd.f32 0.0, %v1966
    %1968 = vmatmul.bf16.gmra.mxu0 %v1819
    %v1969 = vpop.f32.mrf.mxu0
    %v1970 = vadd.f32 0.0, %v1969
    %v1971 = vpop.f32.mrf.mxu0
    %v1972 = vadd.f32 0.0, %v1971
    %1973 = vmatmul.bf16.gmra.mxu0 %v1822
    %v1974 = vpop.f32.mrf.mxu0
    %v1975 = vadd.f32 0.0, %v1974
    %v1976 = vpop.f32.mrf.mxu0
    %v1977 = vadd.f32 0.0, %v1976
    %1978 = vmatmul.bf16.gmra.mxu0 %v1825
    %v1979 = vpop.f32.mrf.mxu0
    %v1980 = vadd.f32 0.0, %v1979
    %v1981 = vpop.f32.mrf.mxu0
    %v1982 = vadd.f32 0.0, %v1981
    %1983 = vmatmul.bf16.gmra.mxu0 %v1828
    %v1984 = vpop.f32.mrf.mxu0
    %v1985 = vadd.f32 0.0, %v1984
    %v1986 = vpop.f32.mrf.mxu0
    %v1987 = vadd.f32 0.0, %v1986
    %1988 = vmatmul.bf16.gmra.mxu0 %v1831
    %v1989 = vpop.f32.mrf.mxu0
    %v1990 = vadd.f32 0.0, %v1989
    %v1991 = vpop.f32.mrf.mxu0
    %v1992 = vadd.f32 0.0, %v1991
    %1993 = vmatmul.bf16.gmra.mxu0 %v1834
    %v1994 = vpop.f32.mrf.mxu0
    %v1995 = vadd.f32 0.0, %v1994
    %v1996 = vpop.f32.mrf.mxu0
    %v1997 = vadd.f32 0.0, %v1996
    %1998 = vmatmul.bf16.gmra.mxu0 %v1837
    %v1999 = vpop.f32.mrf.mxu0
    %v2000 = vadd.f32 0.0, %v1999
    %v2001 = vpop.f32.mrf.mxu0
    %v2002 = vadd.f32 0.0, %v2001
    %2003 = vmatmul.bf16.gmra.mxu0 %v1840
    %v2004 = vpop.f32.mrf.mxu0
    %v2005 = vadd.f32 0.0, %v2004
    %v2006 = vpop.f32.mrf.mxu0
    %v2007 = vadd.f32 0.0, %v2006
    %2008 = vmatmul.bf16.gmra.mxu0 %v1843
    %v2009 = vpop.f32.mrf.mxu0
    %v2010 = vadd.f32 0.0, %v2009
    %v2011 = vpop.f32.mrf.mxu0
    %v2012 = vadd.f32 0.0, %v2011
    %2013 = vdwg.mxu0
    %v2014 = vld [vmem:[%s96] sm:$0xf]
    %v2015 = vld [vmem:[%s96 + $0x4] sm:$0xf]
    %v2016 = vld [vmem:[%s96 + $0x8] sm:$0xf]
    %v2017 = vld [vmem:[%s96 + $0xc] sm:$0xf]
    %v2018 = vld [vmem:[%s96 + $0x10] sm:$0xf]
    %v2019 = vld [vmem:[%s96 + $0x14] sm:$0xf]
    %v2020 = vld [vmem:[%s96 + $0x18] sm:$0xf]
    %v2021 = vld [vmem:[%s96 + $0x1c] sm:$0xf]
    %v2022 = vld [vmem:[%s96 + $0x20] sm:$0xf]
    %v2023 = vld [vmem:[%s96 + $0x24] sm:$0xf]
    %v2024 = vld [vmem:[%s96 + $0x28] sm:$0xf]
    %v2025 = vld [vmem:[%s96 + $0x2c] sm:$0xf]
    %v2026 = vld [vmem:[%s96 + $0x30] sm:$0xf]
    %v2027 = vld [vmem:[%s96 + $0x34] sm:$0xf]
    %v2028 = vld [vmem:[%s96 + $0x38] sm:$0xf]
    %v2029 = vld [vmem:[%s96 + $0x3c] sm:$0xf]
    %v2030 = vld [vmem:[%s96 + $0x40] sm:$0xf]
    %v2031 = vld [vmem:[%s96 + $0x44] sm:$0xf]
    %v2032 = vld [vmem:[%s96 + $0x48] sm:$0xf]
    %v2033 = vld [vmem:[%s96 + $0x4c] sm:$0xf]
    %v2034 = vld [vmem:[%s96 + $0x50] sm:$0xf]
    %v2035 = vld [vmem:[%s96 + $0x54] sm:$0xf]
    %v2036 = vld [vmem:[%s96 + $0x58] sm:$0xf]
    %v2037 = vld [vmem:[%s96 + $0x5c] sm:$0xf]
    %v2038 = vld [vmem:[%s96 + $0x60] sm:$0xf]
    %v2039 = vld [vmem:[%s96 + $0x64] sm:$0xf]
    %v2040 = vld [vmem:[%s96 + $0x68] sm:$0xf]
    %v2041 = vld [vmem:[%s96 + $0x6c] sm:$0xf]
    %v2042 = vld [vmem:[%s96 + $0x70] sm:$0xf]
    %v2043 = vld [vmem:[%s96 + $0x74] sm:$0xf]
    %v2044 = vld [vmem:[%s96 + $0x78] sm:$0xf]
    %v2045 = vld [vmem:[%s96 + $0x7c] sm:$0xf]
    %v2046 = vld [vmem:[%s96 + $0x80] sm:$0xf]
    %v2047 = vld [vmem:[%s96 + $0x84] sm:$0xf]
    %v2048 = vld [vmem:[%s96 + $0x88] sm:$0xf]
    %v2049 = vld [vmem:[%s96 + $0x8c] sm:$0xf]
    %v2050 = vld [vmem:[%s96 + $0x90] sm:$0xf]
    %v2051 = vld [vmem:[%s96 + $0x94] sm:$0xf]
    %v2052 = vld [vmem:[%s96 + $0x98] sm:$0xf]
    %v2053 = vld [vmem:[%s96 + $0x9c] sm:$0xf]
    %v2054 = vld [vmem:[%s96 + $0xa0] sm:$0xf]
    %v2055 = vld [vmem:[%s96 + $0xa4] sm:$0xf]
    %v2056 = vld [vmem:[%s96 + $0xa8] sm:$0xf]
    %v2057 = vld [vmem:[%s96 + $0xac] sm:$0xf]
    %v2058 = vld [vmem:[%s96 + $0xb0] sm:$0xf]
    %v2059 = vld [vmem:[%s96 + $0xb4] sm:$0xf]
    %v2060 = vld [vmem:[%s96 + $0xb8] sm:$0xf]
    %v2061 = vld [vmem:[%s96 + $0xbc] sm:$0xf]
    %v2062 = vld [vmem:[%s96 + $0xc0] sm:$0xf]
    %v2063 = vld [vmem:[%s96 + $0xc4] sm:$0xf]
    %v2064 = vld [vmem:[%s96 + $0xc8] sm:$0xf]
    %v2065 = vld [vmem:[%s96 + $0xcc] sm:$0xf]
    %v2066 = vld [vmem:[%s96 + $0xd0] sm:$0xf]
    %v2067 = vld [vmem:[%s96 + $0xd4] sm:$0xf]
    %v2068 = vld [vmem:[%s96 + $0xd8] sm:$0xf]
    %v2069 = vld [vmem:[%s96 + $0xdc] sm:$0xf]
    %v2070 = vld [vmem:[%s96 + $0xe0] sm:$0xf]
    %v2071 = vld [vmem:[%s96 + $0xe4] sm:$0xf]
    %v2072 = vld [vmem:[%s96 + $0xe8] sm:$0xf]
    %v2073 = vld [vmem:[%s96 + $0xec] sm:$0xf]
    %v2074 = vld [vmem:[%s96 + $0xf0] sm:$0xf]
    %v2075 = vld [vmem:[%s96 + $0xf4] sm:$0xf]
    %v2076 = vld [vmem:[%s96 + $0xf8] sm:$0xf]
    %v2077 = vld [vmem:[%s96 + $0xfc] sm:$0xf]
    %v2078 = vunpack.c.l.bf16 %v2014
    %v2079 = vunpack.c.l.bf16 %v2015
    %v2080 = vunpack.c.l.bf16 %v2016
    %v2081 = vunpack.c.l.bf16 %v2017
    %v2082 = vunpack.c.l.bf16 %v2018
    %v2083 = vunpack.c.l.bf16 %v2019
    %v2084 = vunpack.c.l.bf16 %v2020
    %v2085 = vunpack.c.l.bf16 %v2021
    %v2086 = vunpack.c.l.bf16 %v2022
    %v2087 = vunpack.c.l.bf16 %v2023
    %v2088 = vunpack.c.l.bf16 %v2024
    %v2089 = vunpack.c.l.bf16 %v2025
    %v2090 = vunpack.c.l.bf16 %v2026
    %v2091 = vunpack.c.l.bf16 %v2027
    %v2092 = vunpack.c.l.bf16 %v2028
    %v2093 = vunpack.c.l.bf16 %v2029
    %v2094 = vunpack.c.l.bf16 %v2030
    %v2095 = vunpack.c.l.bf16 %v2031
    %v2096 = vunpack.c.l.bf16 %v2032
    %v2097 = vunpack.c.l.bf16 %v2033
    %v2098 = vunpack.c.l.bf16 %v2034
    %v2099 = vunpack.c.l.bf16 %v2035
    %v2100 = vunpack.c.l.bf16 %v2036
    %v2101 = vunpack.c.l.bf16 %v2037
    %v2102 = vunpack.c.l.bf16 %v2038
    %v2103 = vunpack.c.l.bf16 %v2039
    %v2104 = vunpack.c.l.bf16 %v2040
    %v2105 = vunpack.c.l.bf16 %v2041
    %v2106 = vunpack.c.l.bf16 %v2042
    %v2107 = vunpack.c.l.bf16 %v2043
    %v2108 = vunpack.c.l.bf16 %v2044
    %v2109 = vunpack.c.l.bf16 %v2045
    %v2110 = vunpack.c.l.bf16 %v2046
    %v2111 = vunpack.c.l.bf16 %v2047
    %v2112 = vunpack.c.l.bf16 %v2048
    %v2113 = vunpack.c.l.bf16 %v2049
    %v2114 = vunpack.c.l.bf16 %v2050
    %v2115 = vunpack.c.l.bf16 %v2051
    %v2116 = vunpack.c.l.bf16 %v2052
    %v2117 = vunpack.c.l.bf16 %v2053
    %v2118 = vunpack.c.l.bf16 %v2054
    %v2119 = vunpack.c.l.bf16 %v2055
    %v2120 = vunpack.c.l.bf16 %v2056
    %v2121 = vunpack.c.l.bf16 %v2057
    %v2122 = vunpack.c.l.bf16 %v2058
    %v2123 = vunpack.c.l.bf16 %v2059
    %v2124 = vunpack.c.l.bf16 %v2060
    %v2125 = vunpack.c.l.bf16 %v2061
    %v2126 = vunpack.c.l.bf16 %v2062
    %v2127 = vunpack.c.l.bf16 %v2063
    %v2128 = vunpack.c.l.bf16 %v2064
    %v2129 = vunpack.c.l.bf16 %v2065
    %v2130 = vunpack.c.l.bf16 %v2066
    %v2131 = vunpack.c.l.bf16 %v2067
    %v2132 = vunpack.c.l.bf16 %v2068
    %v2133 = vunpack.c.l.bf16 %v2069
    %v2134 = vunpack.c.l.bf16 %v2070
    %v2135 = vunpack.c.l.bf16 %v2071
    %v2136 = vunpack.c.l.bf16 %v2072
    %v2137 = vunpack.c.l.bf16 %v2073
    %v2138 = vunpack.c.l.bf16 %v2074
    %v2139 = vunpack.c.l.bf16 %v2075
    %v2140 = vunpack.c.l.bf16 %v2076
    %v2141 = vunpack.c.l.bf16 %v2077
    %v2142 = vld [vmem:[%s104] sm:$0xf]
    %v2143 = vld [vmem:[%s104 + $0x4] sm:$0xf]
    %v2144 = vld [vmem:[%s104 + $0x8] sm:$0xf]
    %v2145 = vld [vmem:[%s104 + $0xc] sm:$0xf]
    %v2146 = vld [vmem:[%s104 + $0x10] sm:$0xf]
    %v2147 = vld [vmem:[%s104 + $0x14] sm:$0xf]
    %v2148 = vld [vmem:[%s104 + $0x18] sm:$0xf]
    %v2149 = vld [vmem:[%s104 + $0x1c] sm:$0xf]
    %v2150 = vld [vmem:[%s104 + $0x20] sm:$0xf]
    %v2151 = vld [vmem:[%s104 + $0x24] sm:$0xf]
    %v2152 = vld [vmem:[%s104 + $0x28] sm:$0xf]
    %v2153 = vld [vmem:[%s104 + $0x2c] sm:$0xf]
    %v2154 = vld [vmem:[%s104 + $0x30] sm:$0xf]
    %v2155 = vld [vmem:[%s104 + $0x34] sm:$0xf]
    %v2156 = vld [vmem:[%s104 + $0x38] sm:$0xf]
    %v2157 = vld [vmem:[%s104 + $0x3c] sm:$0xf]
    %v2158 = vld [vmem:[%s104 + $0x40] sm:$0xf]
    %v2159 = vld [vmem:[%s104 + $0x44] sm:$0xf]
    %v2160 = vld [vmem:[%s104 + $0x48] sm:$0xf]
    %v2161 = vld [vmem:[%s104 + $0x4c] sm:$0xf]
    %v2162 = vld [vmem:[%s104 + $0x50] sm:$0xf]
    %v2163 = vld [vmem:[%s104 + $0x54] sm:$0xf]
    %v2164 = vld [vmem:[%s104 + $0x58] sm:$0xf]
    %v2165 = vld [vmem:[%s104 + $0x5c] sm:$0xf]
    %v2166 = vld [vmem:[%s104 + $0x60] sm:$0xf]
    %v2167 = vld [vmem:[%s104 + $0x64] sm:$0xf]
    %v2168 = vld [vmem:[%s104 + $0x68] sm:$0xf]
    %v2169 = vld [vmem:[%s104 + $0x6c] sm:$0xf]
    %v2170 = vld [vmem:[%s104 + $0x70] sm:$0xf]
    %v2171 = vld [vmem:[%s104 + $0x74] sm:$0xf]
    %v2172 = vld [vmem:[%s104 + $0x78] sm:$0xf]
    %v2173 = vld [vmem:[%s104 + $0x7c] sm:$0xf]
    %v2174 = vld [vmem:[%s104 + $0x80] sm:$0xf]
    %v2175 = vld [vmem:[%s104 + $0x84] sm:$0xf]
    %v2176 = vld [vmem:[%s104 + $0x88] sm:$0xf]
    %v2177 = vld [vmem:[%s104 + $0x8c] sm:$0xf]
    %v2178 = vld [vmem:[%s104 + $0x90] sm:$0xf]
    %v2179 = vld [vmem:[%s104 + $0x94] sm:$0xf]
    %v2180 = vld [vmem:[%s104 + $0x98] sm:$0xf]
    %v2181 = vld [vmem:[%s104 + $0x9c] sm:$0xf]
    %v2182 = vld [vmem:[%s104 + $0xa0] sm:$0xf]
    %v2183 = vld [vmem:[%s104 + $0xa4] sm:$0xf]
    %v2184 = vld [vmem:[%s104 + $0xa8] sm:$0xf]
    %v2185 = vld [vmem:[%s104 + $0xac] sm:$0xf]
    %v2186 = vld [vmem:[%s104 + $0xb0] sm:$0xf]
    %v2187 = vld [vmem:[%s104 + $0xb4] sm:$0xf]
    %v2188 = vld [vmem:[%s104 + $0xb8] sm:$0xf]
    %v2189 = vld [vmem:[%s104 + $0xbc] sm:$0xf]
    %v2190 = vld [vmem:[%s104 + $0xc0] sm:$0xf]
    %v2191 = vld [vmem:[%s104 + $0xc4] sm:$0xf]
    %v2192 = vld [vmem:[%s104 + $0xc8] sm:$0xf]
    %v2193 = vld [vmem:[%s104 + $0xcc] sm:$0xf]
    %v2194 = vld [vmem:[%s104 + $0xd0] sm:$0xf]
    %v2195 = vld [vmem:[%s104 + $0xd4] sm:$0xf]
    %v2196 = vld [vmem:[%s104 + $0xd8] sm:$0xf]
    %v2197 = vld [vmem:[%s104 + $0xdc] sm:$0xf]
    %v2198 = vld [vmem:[%s104 + $0xe0] sm:$0xf]
    %v2199 = vld [vmem:[%s104 + $0xe4] sm:$0xf]
    %v2200 = vld [vmem:[%s104 + $0xe8] sm:$0xf]
    %v2201 = vld [vmem:[%s104 + $0xec] sm:$0xf]
    %v2202 = vld [vmem:[%s104 + $0xf0] sm:$0xf]
    %v2203 = vld [vmem:[%s104 + $0xf4] sm:$0xf]
    %v2204 = vld [vmem:[%s104 + $0xf8] sm:$0xf]
    %v2205 = vld [vmem:[%s104 + $0xfc] sm:$0xf]
    %v2206 = vunpack.c.l.bf16 %v2142
    %v2207 = vunpack.c.l.bf16 %v2143
    %v2208 = vunpack.c.l.bf16 %v2144
    %v2209 = vunpack.c.l.bf16 %v2145
    %v2210 = vunpack.c.l.bf16 %v2146
    %v2211 = vunpack.c.l.bf16 %v2147
    %v2212 = vunpack.c.l.bf16 %v2148
    %v2213 = vunpack.c.l.bf16 %v2149
    %v2214 = vunpack.c.l.bf16 %v2150
    %v2215 = vunpack.c.l.bf16 %v2151
    %v2216 = vunpack.c.l.bf16 %v2152
    %v2217 = vunpack.c.l.bf16 %v2153
    %v2218 = vunpack.c.l.bf16 %v2154
    %v2219 = vunpack.c.l.bf16 %v2155
    %v2220 = vunpack.c.l.bf16 %v2156
    %v2221 = vunpack.c.l.bf16 %v2157
    %v2222 = vunpack.c.l.bf16 %v2158
    %v2223 = vunpack.c.l.bf16 %v2159
    %v2224 = vunpack.c.l.bf16 %v2160
    %v2225 = vunpack.c.l.bf16 %v2161
    %v2226 = vunpack.c.l.bf16 %v2162
    %v2227 = vunpack.c.l.bf16 %v2163
    %v2228 = vunpack.c.l.bf16 %v2164
    %v2229 = vunpack.c.l.bf16 %v2165
    %v2230 = vunpack.c.l.bf16 %v2166
    %v2231 = vunpack.c.l.bf16 %v2167
    %v2232 = vunpack.c.l.bf16 %v2168
    %v2233 = vunpack.c.l.bf16 %v2169
    %v2234 = vunpack.c.l.bf16 %v2170
    %v2235 = vunpack.c.l.bf16 %v2171
    %v2236 = vunpack.c.l.bf16 %v2172
    %v2237 = vunpack.c.l.bf16 %v2173
    %v2238 = vunpack.c.l.bf16 %v2174
    %v2239 = vunpack.c.l.bf16 %v2175
    %v2240 = vunpack.c.l.bf16 %v2176
    %v2241 = vunpack.c.l.bf16 %v2177
    %v2242 = vunpack.c.l.bf16 %v2178
    %v2243 = vunpack.c.l.bf16 %v2179
    %v2244 = vunpack.c.l.bf16 %v2180
    %v2245 = vunpack.c.l.bf16 %v2181
    %v2246 = vunpack.c.l.bf16 %v2182
    %v2247 = vunpack.c.l.bf16 %v2183
    %v2248 = vunpack.c.l.bf16 %v2184
    %v2249 = vunpack.c.l.bf16 %v2185
    %v2250 = vunpack.c.l.bf16 %v2186
    %v2251 = vunpack.c.l.bf16 %v2187
    %v2252 = vunpack.c.l.bf16 %v2188
    %v2253 = vunpack.c.l.bf16 %v2189
    %v2254 = vunpack.c.l.bf16 %v2190
    %v2255 = vunpack.c.l.bf16 %v2191
    %v2256 = vunpack.c.l.bf16 %v2192
    %v2257 = vunpack.c.l.bf16 %v2193
    %v2258 = vunpack.c.l.bf16 %v2194
    %v2259 = vunpack.c.l.bf16 %v2195
    %v2260 = vunpack.c.l.bf16 %v2196
    %v2261 = vunpack.c.l.bf16 %v2197
    %v2262 = vunpack.c.l.bf16 %v2198
    %v2263 = vunpack.c.l.bf16 %v2199
    %v2264 = vunpack.c.l.bf16 %v2200
    %v2265 = vunpack.c.l.bf16 %v2201
    %v2266 = vunpack.c.l.bf16 %v2202
    %v2267 = vunpack.c.l.bf16 %v2203
    %v2268 = vunpack.c.l.bf16 %v2204
    %v2269 = vunpack.c.l.bf16 %v2205
    %v2270 = vmul.f32 %v2078, %v2206
    %v2271 = vmul.f32 %v2079, %v2207
    %v2272 = vmul.f32 %v2080, %v2208
    %v2273 = vmul.f32 %v2081, %v2209
    %v2274 = vmul.f32 %v2082, %v2210
    %v2275 = vmul.f32 %v2083, %v2211
    %v2276 = vmul.f32 %v2084, %v2212
    %v2277 = vmul.f32 %v2085, %v2213
    %v2278 = vmul.f32 %v2086, %v2214
    %v2279 = vmul.f32 %v2087, %v2215
    %v2280 = vmul.f32 %v2088, %v2216
    %v2281 = vmul.f32 %v2089, %v2217
    %v2282 = vmul.f32 %v2090, %v2218
    %v2283 = vmul.f32 %v2091, %v2219
    %v2284 = vmul.f32 %v2092, %v2220
    %v2285 = vmul.f32 %v2093, %v2221
    %v2286 = vmul.f32 %v2094, %v2222
    %v2287 = vmul.f32 %v2095, %v2223
    %v2288 = vmul.f32 %v2096, %v2224
    %v2289 = vmul.f32 %v2097, %v2225
    %v2290 = vmul.f32 %v2098, %v2226
    %v2291 = vmul.f32 %v2099, %v2227
    %v2292 = vmul.f32 %v2100, %v2228
    %v2293 = vmul.f32 %v2101, %v2229
    %v2294 = vmul.f32 %v2102, %v2230
    %v2295 = vmul.f32 %v2103, %v2231
    %v2296 = vmul.f32 %v2104, %v2232
    %v2297 = vmul.f32 %v2105, %v2233
    %v2298 = vmul.f32 %v2106, %v2234
    %v2299 = vmul.f32 %v2107, %v2235
    %v2300 = vmul.f32 %v2108, %v2236
    %v2301 = vmul.f32 %v2109, %v2237
    %v2302 = vmul.f32 %v2110, %v2238
    %v2303 = vmul.f32 %v2111, %v2239
    %v2304 = vmul.f32 %v2112, %v2240
    %v2305 = vmul.f32 %v2113, %v2241
    %v2306 = vmul.f32 %v2114, %v2242
    %v2307 = vmul.f32 %v2115, %v2243
    %v2308 = vmul.f32 %v2116, %v2244
    %v2309 = vmul.f32 %v2117, %v2245
    %v2310 = vmul.f32 %v2118, %v2246
    %v2311 = vmul.f32 %v2119, %v2247
    %v2312 = vmul.f32 %v2120, %v2248
    %v2313 = vmul.f32 %v2121, %v2249
    %v2314 = vmul.f32 %v2122, %v2250
    %v2315 = vmul.f32 %v2123, %v2251
    %v2316 = vmul.f32 %v2124, %v2252
    %v2317 = vmul.f32 %v2125, %v2253
    %v2318 = vmul.f32 %v2126, %v2254
    %v2319 = vmul.f32 %v2127, %v2255
    %v2320 = vmul.f32 %v2128, %v2256
    %v2321 = vmul.f32 %v2129, %v2257
    %v2322 = vmul.f32 %v2130, %v2258
    %v2323 = vmul.f32 %v2131, %v2259
    %v2324 = vmul.f32 %v2132, %v2260
    %v2325 = vmul.f32 %v2133, %v2261
    %v2326 = vmul.f32 %v2134, %v2262
    %v2327 = vmul.f32 %v2135, %v2263
    %v2328 = vmul.f32 %v2136, %v2264
    %v2329 = vmul.f32 %v2137, %v2265
    %v2330 = vmul.f32 %v2138, %v2266
    %v2331 = vmul.f32 %v2139, %v2267
    %v2332 = vmul.f32 %v2140, %v2268
    %v2333 = vmul.f32 %v2141, %v2269
    %v2334 = vpack.c.bf16 %v2271, %v2270
    %v2335 = vpack.c.bf16 %v2273, %v2272
    %v2336 = vpack.c.bf16 %v2275, %v2274
    %v2337 = vpack.c.bf16 %v2277, %v2276
    %v2338 = vpack.c.bf16 %v2279, %v2278
    %v2339 = vpack.c.bf16 %v2281, %v2280
    %v2340 = vpack.c.bf16 %v2283, %v2282
    %v2341 = vpack.c.bf16 %v2285, %v2284
    %v2342 = vpack.c.bf16 %v2287, %v2286
    %v2343 = vpack.c.bf16 %v2289, %v2288
    %v2344 = vpack.c.bf16 %v2291, %v2290
    %v2345 = vpack.c.bf16 %v2293, %v2292
    %v2346 = vpack.c.bf16 %v2295, %v2294
    %v2347 = vpack.c.bf16 %v2297, %v2296
    %v2348 = vpack.c.bf16 %v2299, %v2298
    %v2349 = vpack.c.bf16 %v2301, %v2300
    %v2350 = vpack.c.bf16 %v2303, %v2302
    %v2351 = vpack.c.bf16 %v2305, %v2304
    %v2352 = vpack.c.bf16 %v2307, %v2306
    %v2353 = vpack.c.bf16 %v2309, %v2308
    %v2354 = vpack.c.bf16 %v2311, %v2310
    %v2355 = vpack.c.bf16 %v2313, %v2312
    %v2356 = vpack.c.bf16 %v2315, %v2314
    %v2357 = vpack.c.bf16 %v2317, %v2316
    %v2358 = vpack.c.bf16 %v2319, %v2318
    %v2359 = vpack.c.bf16 %v2321, %v2320
    %v2360 = vpack.c.bf16 %v2323, %v2322
    %v2361 = vpack.c.bf16 %v2325, %v2324
    %v2362 = vpack.c.bf16 %v2327, %v2326
    %v2363 = vpack.c.bf16 %v2329, %v2328
    %v2364 = vpack.c.bf16 %v2331, %v2330
    %v2365 = vpack.c.bf16 %v2333, %v2332
    %v2366 = vld [vmem:[%s7] sm:$0xf]
    %v2367 = vld [vmem:[%s7 + $0x4] sm:$0xf]
    %v2368 = vld [vmem:[%s7 + $0x8] sm:$0xf]
    %v2369 = vld [vmem:[%s7 + $0xc] sm:$0xf]
    %v2370 = vld [vmem:[%s7 + $0x10] sm:$0xf]
    %v2371 = vld [vmem:[%s7 + $0x14] sm:$0xf]
    %v2372 = vld [vmem:[%s7 + $0x18] sm:$0xf]
    %v2373 = vld [vmem:[%s7 + $0x1c] sm:$0xf]
    %v2374 = vld [vmem:[%s7 + $0x20] sm:$0xf]
    %v2375 = vld [vmem:[%s7 + $0x24] sm:$0xf]
    %v2376 = vld [vmem:[%s7 + $0x28] sm:$0xf]
    %v2377 = vld [vmem:[%s7 + $0x2c] sm:$0xf]
    %v2378 = vld [vmem:[%s7 + $0x30] sm:$0x3]
    %v2392 = vunpack.c.l.b16 %v2366
    %v2393 = vunpack.c.l.b16 %v2367
    %v2394 = vunpack.c.l.b16 %v2368
    %v2395 = vunpack.c.l.b16 %v2369
    %v2396 = vunpack.c.l.b16 %v2370
    %v2397 = vunpack.c.l.b16 %v2371
    %v2398 = vunpack.c.l.b16 %v2372
    %v2399 = vunpack.c.l.b16 %v2373
    %v2400 = vunpack.c.l.b16 %v2374
    %v2401 = vunpack.c.l.b16 %v2375
    %v2402 = vunpack.c.l.b16 %v2376
    %v2403 = vunpack.c.l.b16 %v2377
    %v2404 = vunpack.c.l.b16 %v2378
    %v2405 = vpack.c.b16 %v2393, %v2392
    %v2406 = vpack.c.b16 %v2395, %v2394
    %v2407 = vpack.c.b16 %v2397, %v2396
    %v2408 = vpack.c.b16 %v2399, %v2398
    %v2409 = vpack.c.b16 %v2401, %v2400
    %v2410 = vpack.c.b16 %v2403, %v2402
    %v2411 = vpack.c.b16 %v2404, %v2404
    %vm2418 = vcmask 818176
    %v2420 = vsel %vm2418, %v2334, 0
    %v2423 = vsel %vm2418, %v2335, 0
    %v2426 = vsel %vm2418, %v2336, 0
    %v2429 = vsel %vm2418, %v2337, 0
    %v2432 = vsel %vm2418, %v2338, 0
    %v2435 = vsel %vm2418, %v2339, 0
    %v2438 = vsel %vm2418, %v2340, 0
    %v2441 = vsel %vm2418, %v2341, 0
    %v2444 = vsel %vm2418, %v2342, 0
    %v2447 = vsel %vm2418, %v2343, 0
    %v2450 = vsel %vm2418, %v2344, 0
    %v2453 = vsel %vm2418, %v2345, 0
    %v2456 = vsel %vm2418, %v2346, 0
    %v2459 = vsel %vm2418, %v2347, 0
    %v2462 = vsel %vm2418, %v2348, 0
    %v2465 = vsel %vm2418, %v2349, 0
    %v2468 = vsel %vm2418, %v2350, 0
    %v2471 = vsel %vm2418, %v2351, 0
    %v2474 = vsel %vm2418, %v2352, 0
    %v2477 = vsel %vm2418, %v2353, 0
    %v2480 = vsel %vm2418, %v2354, 0
    %v2483 = vsel %vm2418, %v2355, 0
    %v2486 = vsel %vm2418, %v2356, 0
    %v2489 = vsel %vm2418, %v2357, 0
    %v2492 = vsel %vm2418, %v2358, 0
    %v2495 = vsel %vm2418, %v2359, 0
    %v2498 = vsel %vm2418, %v2360, 0
    %v2501 = vsel %vm2418, %v2361, 0
    %v2504 = vsel %vm2418, %v2362, 0
    %v2507 = vsel %vm2418, %v2363, 0
    %v2510 = vsel %vm2418, %v2364, 0
    %v2513 = vsel %vm2418, %v2365, 0
    %vm2515 = vcmask 1041408
    %v2517 = vsel %vm2515, %v2411, 0
    %2519 = vmatpush.bf16.msra.mxu0 0
    %2520 = vmatpush.bf16.msra.mxu0 %v2517
    %2521 = vmatpush.bf16.msra.mxu0 %v2410
    %2522 = vmatpush.bf16.msra.mxu0 %v2409
    %2523 = vmatpush.bf16.msra.mxu0 %v2408
    %2524 = vmatpush.bf16.msra.mxu0 %v2407
    %2525 = vmatpush.bf16.msra.mxu0 %v2406
    %2526 = vmatpush.bf16.msra.mxu0 %v2405
    %2527 = vmatmul.bf16.gmra.mxu0 %v2420
    %v2528 = vpop.f32.mrf.mxu0
    %v2529 = vadd.f32 0.0, %v2528
    %v2530 = vpop.f32.mrf.mxu0
    %v2531 = vadd.f32 0.0, %v2530
    %2532 = vmatmul.bf16.gmra.mxu0 %v2423
    %v2533 = vpop.f32.mrf.mxu0
    %v2534 = vadd.f32 0.0, %v2533
    %v2535 = vpop.f32.mrf.mxu0
    %v2536 = vadd.f32 0.0, %v2535
    %2537 = vmatmul.bf16.gmra.mxu0 %v2426
    %v2538 = vpop.f32.mrf.mxu0
    %v2539 = vadd.f32 0.0, %v2538
    %v2540 = vpop.f32.mrf.mxu0
    %v2541 = vadd.f32 0.0, %v2540
    %2542 = vmatmul.bf16.gmra.mxu0 %v2429
    %v2543 = vpop.f32.mrf.mxu0
    %v2544 = vadd.f32 0.0, %v2543
    %v2545 = vpop.f32.mrf.mxu0
    %v2546 = vadd.f32 0.0, %v2545
    %2547 = vmatmul.bf16.gmra.mxu0 %v2432
    %v2548 = vpop.f32.mrf.mxu0
    %v2549 = vadd.f32 0.0, %v2548
    %v2550 = vpop.f32.mrf.mxu0
    %v2551 = vadd.f32 0.0, %v2550
    %2552 = vmatmul.bf16.gmra.mxu0 %v2435
    %v2553 = vpop.f32.mrf.mxu0
    %v2554 = vadd.f32 0.0, %v2553
    %v2555 = vpop.f32.mrf.mxu0
    %v2556 = vadd.f32 0.0, %v2555
    %2557 = vmatmul.bf16.gmra.mxu0 %v2438
    %v2558 = vpop.f32.mrf.mxu0
    %v2559 = vadd.f32 0.0, %v2558
    %v2560 = vpop.f32.mrf.mxu0
    %v2561 = vadd.f32 0.0, %v2560
    %2562 = vmatmul.bf16.gmra.mxu0 %v2441
    %v2563 = vpop.f32.mrf.mxu0
    %v2564 = vadd.f32 0.0, %v2563
    %v2565 = vpop.f32.mrf.mxu0
    %v2566 = vadd.f32 0.0, %v2565
    %2567 = vmatmul.bf16.gmra.mxu0 %v2444
    %v2568 = vpop.f32.mrf.mxu0
    %v2569 = vadd.f32 0.0, %v2568
    %v2570 = vpop.f32.mrf.mxu0
    %v2571 = vadd.f32 0.0, %v2570
    %2572 = vmatmul.bf16.gmra.mxu0 %v2447
    %v2573 = vpop.f32.mrf.mxu0
    %v2574 = vadd.f32 0.0, %v2573
    %v2575 = vpop.f32.mrf.mxu0
    %v2576 = vadd.f32 0.0, %v2575
    %2577 = vmatmul.bf16.gmra.mxu0 %v2450
    %v2578 = vpop.f32.mrf.mxu0
    %v2579 = vadd.f32 0.0, %v2578
    %v2580 = vpop.f32.mrf.mxu0
    %v2581 = vadd.f32 0.0, %v2580
    %2582 = vmatmul.bf16.gmra.mxu0 %v2453
    %v2583 = vpop.f32.mrf.mxu0
    %v2584 = vadd.f32 0.0, %v2583
    %v2585 = vpop.f32.mrf.mxu0
    %v2586 = vadd.f32 0.0, %v2585
    %2587 = vmatmul.bf16.gmra.mxu0 %v2456
    %v2588 = vpop.f32.mrf.mxu0
    %v2589 = vadd.f32 0.0, %v2588
    %v2590 = vpop.f32.mrf.mxu0
    %v2591 = vadd.f32 0.0, %v2590
    %2592 = vmatmul.bf16.gmra.mxu0 %v2459
    %v2593 = vpop.f32.mrf.mxu0
    %v2594 = vadd.f32 0.0, %v2593
    %v2595 = vpop.f32.mrf.mxu0
    %v2596 = vadd.f32 0.0, %v2595
    %2597 = vmatmul.bf16.gmra.mxu0 %v2462
    %v2598 = vpop.f32.mrf.mxu0
    %v2599 = vadd.f32 0.0, %v2598
    %v2600 = vpop.f32.mrf.mxu0
    %v2601 = vadd.f32 0.0, %v2600
    %2602 = vmatmul.bf16.gmra.mxu0 %v2465
    %v2603 = vpop.f32.mrf.mxu0
    %v2604 = vadd.f32 0.0, %v2603
    %v2605 = vpop.f32.mrf.mxu0
    %v2606 = vadd.f32 0.0, %v2605
    %2607 = vmatmul.bf16.gmra.mxu0 %v2468
    %v2608 = vpop.f32.mrf.mxu0
    %v2609 = vadd.f32 0.0, %v2608
    %v2610 = vpop.f32.mrf.mxu0
    %v2611 = vadd.f32 0.0, %v2610
    %2612 = vmatmul.bf16.gmra.mxu0 %v2471
    %v2613 = vpop.f32.mrf.mxu0
    %v2614 = vadd.f32 0.0, %v2613
    %v2615 = vpop.f32.mrf.mxu0
    %v2616 = vadd.f32 0.0, %v2615
    %2617 = vmatmul.bf16.gmra.mxu0 %v2474
    %v2618 = vpop.f32.mrf.mxu0
    %v2619 = vadd.f32 0.0, %v2618
    %v2620 = vpop.f32.mrf.mxu0
    %v2621 = vadd.f32 0.0, %v2620
    %2622 = vmatmul.bf16.gmra.mxu0 %v2477
    %v2623 = vpop.f32.mrf.mxu0
    %v2624 = vadd.f32 0.0, %v2623
    %v2625 = vpop.f32.mrf.mxu0
    %v2626 = vadd.f32 0.0, %v2625
    %2627 = vmatmul.bf16.gmra.mxu0 %v2480
    %v2628 = vpop.f32.mrf.mxu0
    %v2629 = vadd.f32 0.0, %v2628
    %v2630 = vpop.f32.mrf.mxu0
    %v2631 = vadd.f32 0.0, %v2630
    %2632 = vmatmul.bf16.gmra.mxu0 %v2483
    %v2633 = vpop.f32.mrf.mxu0
    %v2634 = vadd.f32 0.0, %v2633
    %v2635 = vpop.f32.mrf.mxu0
    %v2636 = vadd.f32 0.0, %v2635
    %2637 = vmatmul.bf16.gmra.mxu0 %v2486
    %v2638 = vpop.f32.mrf.mxu0
    %v2639 = vadd.f32 0.0, %v2638
    %v2640 = vpop.f32.mrf.mxu0
    %v2641 = vadd.f32 0.0, %v2640
    %2642 = vmatmul.bf16.gmra.mxu0 %v2489
    %v2643 = vpop.f32.mrf.mxu0
    %v2644 = vadd.f32 0.0, %v2643
    %v2645 = vpop.f32.mrf.mxu0
    %v2646 = vadd.f32 0.0, %v2645
    %2647 = vmatmul.bf16.gmra.mxu0 %v2492
    %v2648 = vpop.f32.mrf.mxu0
    %v2649 = vadd.f32 0.0, %v2648
    %v2650 = vpop.f32.mrf.mxu0
    %v2651 = vadd.f32 0.0, %v2650
    %2652 = vmatmul.bf16.gmra.mxu0 %v2495
    %v2653 = vpop.f32.mrf.mxu0
    %v2654 = vadd.f32 0.0, %v2653
    %v2655 = vpop.f32.mrf.mxu0
    %v2656 = vadd.f32 0.0, %v2655
    %2657 = vmatmul.bf16.gmra.mxu0 %v2498
    %v2658 = vpop.f32.mrf.mxu0
    %v2659 = vadd.f32 0.0, %v2658
    %v2660 = vpop.f32.mrf.mxu0
    %v2661 = vadd.f32 0.0, %v2660
    %2662 = vmatmul.bf16.gmra.mxu0 %v2501
    %v2663 = vpop.f32.mrf.mxu0
    %v2664 = vadd.f32 0.0, %v2663
    %v2665 = vpop.f32.mrf.mxu0
    %v2666 = vadd.f32 0.0, %v2665
    %2667 = vmatmul.bf16.gmra.mxu0 %v2504
    %v2668 = vpop.f32.mrf.mxu0
    %v2669 = vadd.f32 0.0, %v2668
    %v2670 = vpop.f32.mrf.mxu0
    %v2671 = vadd.f32 0.0, %v2670
    %2672 = vmatmul.bf16.gmra.mxu0 %v2507
    %v2673 = vpop.f32.mrf.mxu0
    %v2674 = vadd.f32 0.0, %v2673
    %v2675 = vpop.f32.mrf.mxu0
    %v2676 = vadd.f32 0.0, %v2675
    %2677 = vmatmul.bf16.gmra.mxu0 %v2510
    %v2678 = vpop.f32.mrf.mxu0
    %v2679 = vadd.f32 0.0, %v2678
    %v2680 = vpop.f32.mrf.mxu0
    %v2681 = vadd.f32 0.0, %v2680
    %2682 = vmatmul.bf16.gmra.mxu0 %v2513
    %v2683 = vpop.f32.mrf.mxu0
    %v2684 = vadd.f32 0.0, %v2683
    %v2685 = vpop.f32.mrf.mxu0
    %v2686 = vadd.f32 0.0, %v2685
    %2687 = vdwg.mxu0
    %v2688 = vmul.f32 %v2529, %v1855
    %v2689 = vmul.f32 %v2531, %v1857
    %v2690 = vmul.f32 %v2534, %v1860
    %v2691 = vmul.f32 %v2536, %v1862
    %v2692 = vmul.f32 %v2539, %v1865
    %v2693 = vmul.f32 %v2541, %v1867
    %v2694 = vmul.f32 %v2544, %v1870
    %v2695 = vmul.f32 %v2546, %v1872
    %v2696 = vmul.f32 %v2549, %v1875
    %v2697 = vmul.f32 %v2551, %v1877
    %v2698 = vmul.f32 %v2554, %v1880
    %v2699 = vmul.f32 %v2556, %v1882
    %v2700 = vmul.f32 %v2559, %v1885
    %v2701 = vmul.f32 %v2561, %v1887
    %v2702 = vmul.f32 %v2564, %v1890
    %v2703 = vmul.f32 %v2566, %v1892
    %v2704 = vmul.f32 %v2569, %v1895
    %v2705 = vmul.f32 %v2571, %v1897
    %v2706 = vmul.f32 %v2574, %v1900
    %v2707 = vmul.f32 %v2576, %v1902
    %v2708 = vmul.f32 %v2579, %v1905
    %v2709 = vmul.f32 %v2581, %v1907
    %v2710 = vmul.f32 %v2584, %v1910
    %v2711 = vmul.f32 %v2586, %v1912
    %v2712 = vmul.f32 %v2589, %v1915
    %v2713 = vmul.f32 %v2591, %v1917
    %v2714 = vmul.f32 %v2594, %v1920
    %v2715 = vmul.f32 %v2596, %v1922
    %v2716 = vmul.f32 %v2599, %v1925
    %v2717 = vmul.f32 %v2601, %v1927
    %v2718 = vmul.f32 %v2604, %v1930
    %v2719 = vmul.f32 %v2606, %v1932
    %v2720 = vmul.f32 %v2609, %v1935
    %v2721 = vmul.f32 %v2611, %v1937
    %v2722 = vmul.f32 %v2614, %v1940
    %v2723 = vmul.f32 %v2616, %v1942
    %v2724 = vmul.f32 %v2619, %v1945
    %v2725 = vmul.f32 %v2621, %v1947
    %v2726 = vmul.f32 %v2624, %v1950
    %v2727 = vmul.f32 %v2626, %v1952
    %v2728 = vmul.f32 %v2629, %v1955
    %v2729 = vmul.f32 %v2631, %v1957
    %v2730 = vmul.f32 %v2634, %v1960
    %v2731 = vmul.f32 %v2636, %v1962
    %v2732 = vmul.f32 %v2639, %v1965
    %v2733 = vmul.f32 %v2641, %v1967
    %v2734 = vmul.f32 %v2644, %v1970
    %v2735 = vmul.f32 %v2646, %v1972
    %v2736 = vmul.f32 %v2649, %v1975
    %v2737 = vmul.f32 %v2651, %v1977
    %v2738 = vmul.f32 %v2654, %v1980
    %v2739 = vmul.f32 %v2656, %v1982
    %v2740 = vmul.f32 %v2659, %v1985
    %v2741 = vmul.f32 %v2661, %v1987
    %v2742 = vmul.f32 %v2664, %v1990
    %v2743 = vmul.f32 %v2666, %v1992
    %v2744 = vmul.f32 %v2669, %v1995
    %v2745 = vmul.f32 %v2671, %v1997
    %v2746 = vmul.f32 %v2674, %v2000
    %v2747 = vmul.f32 %v2676, %v2002
    %v2748 = vmul.f32 %v2679, %v2005
    %v2749 = vmul.f32 %v2681, %v2007
    %v2750 = vmul.f32 %v2684, %v2010
    %v2751 = vmul.f32 %v2686, %v2012
    %v2752 = vpack.c.bf16 %v2689, %v2688
    %v2753 = vpack.c.bf16 %v2691, %v2690
    %v2754 = vpack.c.bf16 %v2693, %v2692
    %v2755 = vpack.c.bf16 %v2695, %v2694
    %v2756 = vpack.c.bf16 %v2697, %v2696
    %v2757 = vpack.c.bf16 %v2699, %v2698
    %v2758 = vpack.c.bf16 %v2701, %v2700
    %v2759 = vpack.c.bf16 %v2703, %v2702
    %v2760 = vpack.c.bf16 %v2705, %v2704
    %v2761 = vpack.c.bf16 %v2707, %v2706
    %v2762 = vpack.c.bf16 %v2709, %v2708
    %v2763 = vpack.c.bf16 %v2711, %v2710
    %v2764 = vpack.c.bf16 %v2713, %v2712
    %v2765 = vpack.c.bf16 %v2715, %v2714
    %v2766 = vpack.c.bf16 %v2717, %v2716
    %v2767 = vpack.c.bf16 %v2719, %v2718
    %v2768 = vpack.c.bf16 %v2721, %v2720
    %v2769 = vpack.c.bf16 %v2723, %v2722
    %v2770 = vpack.c.bf16 %v2725, %v2724
    %v2771 = vpack.c.bf16 %v2727, %v2726
    %v2772 = vpack.c.bf16 %v2729, %v2728
    %v2773 = vpack.c.bf16 %v2731, %v2730
    %v2774 = vpack.c.bf16 %v2733, %v2732
    %v2775 = vpack.c.bf16 %v2735, %v2734
    %v2776 = vpack.c.bf16 %v2737, %v2736
    %v2777 = vpack.c.bf16 %v2739, %v2738
    %v2778 = vpack.c.bf16 %v2741, %v2740
    %v2779 = vpack.c.bf16 %v2743, %v2742
    %v2780 = vpack.c.bf16 %v2745, %v2744
    %v2781 = vpack.c.bf16 %v2747, %v2746
    %v2782 = vpack.c.bf16 %v2749, %v2748
    %v2783 = vpack.c.bf16 %v2751, %v2750
    %v2784 = vld [vmem:[%s88] sm:$0xf]
    %v2785 = vlaneseq
    %v2786 = vshrl.u32 %v2785, 7
    %v2787 = vperm.slane %v2784, 0
    %v2788 = vperm.slane %v2784, 1
    %v2789 = vperm.slane %v2784, 2
    %v2790 = vperm.slane %v2784, 3
    %vm2791 = vcmp.eq.s32.totalorder %v2786, %v2787
    %vm2792 = vcmp.eq.s32.totalorder %v2786, %v2788
    %vm2793 = vcmp.eq.s32.totalorder %v2786, %v2789
    %vm2794 = vcmp.eq.s32.totalorder %v2786, %v2790
    %v2795 = vsel %vm2791, 1, 0
    %v2796 = vsel %vm2792, 1, 0
    %v2797 = vsel %vm2793, 1, 0
    %v2798 = vsel %vm2794, 1, 0
    %v2799 = vcvt.s32.f32 %v2795
    %v2800 = vcvt.s32.f32 %v2796
    %v2801 = vcvt.s32.f32 %v2797
    %v2802 = vcvt.s32.f32 %v2798
    %v2803 = vpack.c.bf16 %v2799, %v2799
    %v2804 = vpack.c.bf16 %v2800, %v2800
    %v2805 = vpack.c.bf16 %v2801, %v2801
    %v2806 = vpack.c.bf16 %v2802, %v2802
    %v2807 = vld [vmem:[#allocation2] sm:$0xff]
    %2808 = vmatpush.bf16.msra.mxu0 %v2759
    %2809 = vmatpush.bf16.msra.mxu0 %v2758
    %2810 = vmatpush.bf16.msra.mxu0 %v2757
    %2811 = vmatpush.bf16.msra.mxu0 %v2756
    %2812 = vmatpush.bf16.msra.mxu0 %v2755
    %2813 = vmatpush.bf16.msra.mxu0 %v2754
    %2814 = vmatpush.bf16.msra.mxu0 %v2753
    %2815 = vmatpush.bf16.msra.mxu0 %v2752
    %2816 = vmatmul.bf16.gmra.mxu0 %v2803
    %v2817 = vpop.f32.mrf.mxu0
    %v2818 = vadd.f32 0.0, %v2817
    %v2819 = vpop.f32.mrf.mxu0
    %2820 = vdwg.mxu0
    %2821 = vmatpush.bf16.msra.mxu0 %v2767
    %2822 = vmatpush.bf16.msra.mxu0 %v2766
    %2823 = vmatpush.bf16.msra.mxu0 %v2765
    %2824 = vmatpush.bf16.msra.mxu0 %v2764
    %2825 = vmatpush.bf16.msra.mxu0 %v2763
    %2826 = vmatpush.bf16.msra.mxu0 %v2762
    %2827 = vmatpush.bf16.msra.mxu0 %v2761
    %2828 = vmatpush.bf16.msra.mxu0 %v2760
    %2829 = vmatmul.bf16.gmra.mxu0 %v2804
    %v2830 = vpop.f32.mrf.mxu0
    %v2831 = vadd.f32 %v2818, %v2830
    %v2832 = vpop.f32.mrf.mxu0
    %2833 = vdwg.mxu0
    %2834 = vmatpush.bf16.msra.mxu0 %v2775
    %2835 = vmatpush.bf16.msra.mxu0 %v2774
    %2836 = vmatpush.bf16.msra.mxu0 %v2773
    %2837 = vmatpush.bf16.msra.mxu0 %v2772
    %2838 = vmatpush.bf16.msra.mxu0 %v2771
    %2839 = vmatpush.bf16.msra.mxu0 %v2770
    %2840 = vmatpush.bf16.msra.mxu0 %v2769
    %2841 = vmatpush.bf16.msra.mxu0 %v2768
    %2842 = vmatmul.bf16.gmra.mxu0 %v2805
    %v2843 = vpop.f32.mrf.mxu0
    %v2844 = vadd.f32 %v2831, %v2843
    %v2845 = vpop.f32.mrf.mxu0
    %2846 = vdwg.mxu0
    %2847 = vmatpush.bf16.msra.mxu0 %v2783
    %2848 = vmatpush.bf16.msra.mxu0 %v2782
    %2849 = vmatpush.bf16.msra.mxu0 %v2781
    %2850 = vmatpush.bf16.msra.mxu0 %v2780
    %2851 = vmatpush.bf16.msra.mxu0 %v2779
    %2852 = vmatpush.bf16.msra.mxu0 %v2778
    %2853 = vmatpush.bf16.msra.mxu0 %v2777
    %2854 = vmatpush.bf16.msra.mxu0 %v2776
    %2855 = vmatmul.bf16.gmra.mxu0 %v2806
    %v2856 = vpop.f32.mrf.mxu0
    %v2857 = vadd.f32 %v2844, %v2856
    %v2858 = vpop.f32.mrf.mxu0
    %2859 = vdwg.mxu0
    %v2860 = vadd.f32 %v2807, %v2857
    %2861 = vst [vmem:[#allocation2] sm:$0xff] %v2860
    // Predicated region
    $region38: #{tpu_custom_call.1} parent=1 // pred_check
      _
    $region39: #{tpu_custom_call.1} parent=1 // pred_check_branch
      %2863 = sbr.rel (0) target = $region41
    $region40: #{tpu_custom_call.1} parent=1 // pred_region
      %2865 = vsyncadd [#allocation3], 0
      %s2867 = sshll.u32 [#allocation2], 4
      %s2868 = int_to_ptr.vmem [resolvable:$true] %s2867
      %s2869 = sshll.u32 %s8, 4
      %s2870 = int_to_ptr.hbm [resolvable:$true] %s2869
      %2872 = dma.vmem_to_hbm [thread:$0]  %s2868, 128, %s2870, [#allocation3]
    $region41: #{tpu_custom_call.1} parent=1 // pred_fallthru
      _
    // Predicated region
    $region42: #{tpu_custom_call.1} parent=1 // pred_check
      _
    $region43: #{tpu_custom_call.1} parent=1 // pred_check_branch
      %2874 = sbr.rel (0) target = $region45
    $region44: #{tpu_custom_call.1} parent=1 // pred_region
      %2876 = dma.done [#allocation3], 128
    $region45: #{tpu_custom_call.1} parent=1 // pred_fallthru
      _
    %2877 = vsyncpa [#allocation3], 1

</llo_original>
